<compile_context>
chip_gen: v6e
topology: v6e:2x2x1
jax: 0.10.0
libtpu: 0.0.40
codegen_flags: <defaults>
</compile_context>

<pallas_src>
import math

import jax
import jax.numpy as jnp
from jax.experimental import pallas as pl
from jax.experimental.pallas import tpu as pltpu


# ----------------------------- shared helper ---------------------------------

def _layernorm(x, gamma, beta, eps):
    mu = jnp.mean(x, axis=-1, keepdims=True)
    var = jnp.mean(jnp.square(x - mu), axis=-1, keepdims=True)
    return (x - mu) * jax.lax.rsqrt(var + eps) * gamma + beta


# ----------------------------- fused Pallas kernel ----------------------------

def fused_forward_kernel(
        # embedding inputs
        v_ref, a_ref, wa_ref, ba_ref, pe_ref,
        # stacked encoder weights (fully VMEM-resident)
        w_attn_ref, w1_ref, w2_ref, vec_ref,
        # head weights + pre-folded (patarget + 2*b2)/3 row
        h1_ref, hb1_ref, gn_ref, bn_ref, h2_ref, pa_ref,
        # outputs
        y_ref, feat_ref):
    S, E = v_ref.shape
    L, _, FF = w1_ref.shape

    # ---- embedding: audio_linear + pos-enc on both streams, concat -> (2S, E)
    pe = pe_ref[...]
    xv = v_ref[...] + pe
    xa = (jnp.dot(a_ref[...], wa_ref[...], preferred_element_type=jnp.float32)
          + ba_ref[...] + pe)
    x = jnp.concatenate([xv, xa], axis=0)

    # ---- L post-norm TransformerEncoderLayers at seq_len == 1:
    # attention == x @ (Wv·Wo) + (bv·Wo + bo), pre-folded at param-prep time.
    # Static Python loop == fully unrolled (L is tiny).
    for l in range(L):
        vecs = vec_ref[l]                       # (8, max(E, FF)) packed rows
        b_attn = vecs[0:1, :E]
        b1 = vecs[1:2, :FF]
        b2 = vecs[2:3, :E]
        g1, be1 = vecs[3:4, :E], vecs[4:5, :E]
        g2, be2 = vecs[5:6, :E], vecs[6:7, :E]

        attn = jnp.dot(x, w_attn_ref[l],
                       preferred_element_type=jnp.float32) + b_attn
        x = _layernorm(x + attn, g1, be1, 1e-5)
        h = jnp.maximum(
            jnp.dot(x, w1_ref[l], preferred_element_type=jnp.float32) + b1, 0.0)
        ff = jnp.dot(h, w2_ref[l], preferred_element_type=jnp.float32) + b2
        x = _layernorm(x + ff, g2, be2, 1e-5)

    # ---- head: shared weights on both halves; drop(p=0.5) is identity (eval).
    hh = jnp.maximum(
        jnp.dot(x, h1_ref[...], preferred_element_type=jnp.float32)
        + hb1_ref[...], 0.0)
    hh = _layernorm(hh, gn_ref[...], bn_ref[...], 1e-6)
    # linear_2 is linear -> sum the two halves before projecting (exact).
    hsum = hh[0:S, :] + hh[S:, :]                                     # (S, E)
    zrow = jax.lax.dot_general(
        h2_ref[...], hsum,
        dimension_numbers=(((1,), (1,)), ((), ())),
        preferred_element_type=jnp.float32)                          # (1, S)
    # bias + patarget + /3 pre-folded into pa_ref outside the kernel.
    y_ref[...] = zrow * (1.0 / 3.0) + pa_ref[...]
    feat_ref[...] = x[0:S, :]


# ----------------------------- parameters ------------------------------------

def positional_encoding_table(seq_len, d_model):
    pos = jnp.arange(seq_len, dtype=jnp.float32)[:, None]
    div = jnp.exp(jnp.arange(0, d_model, 2, dtype=jnp.float32)
                  * (-math.log(10000.0) / d_model))
    pe = jnp.zeros((seq_len, d_model), jnp.float32)
    pe = pe.at[:, 0::2].set(jnp.sin(pos * div))
    pe = pe.at[:, 1::2].set(jnp.cos(pos * div))
    return pe


def _xavier(key, fan_out, fan_in):
    limit = math.sqrt(6.0 / (fan_in + fan_out))
    return jax.random.uniform(key, (fan_out, fan_in), jnp.float32, -limit, limit)


def init_params(key, emb, audio, ff, n_layers):
    """Raw synthetic parameters, shapes mirroring the torch module.

    Weights pre-transposed to (in_features, out_features) so kernels do x @ W;
    biases/scales stored as (1, dim) rows for lane broadcasting.
    """
    ks = list(jax.random.split(key, 3 + n_layers))
    p = {
        "wa_t": _xavier(ks[0], emb, audio).T,           # audio_linear
        "ba": jnp.zeros((1, emb), jnp.float32),
        "h1_t": _xavier(ks[1], emb, emb).T,             # linear_1
        "hb1": jnp.zeros((1, emb), jnp.float32),
        "gn": jnp.ones((1, emb), jnp.float32),          # norm_linear (eps=1e-6)
        "bn": jnp.zeros((1, emb), jnp.float32),
        "h2_row": _xavier(ks[2], 1, emb),               # linear_2 weight, (1, emb)
        "hb2": jnp.full((1, 1), 0.1322, jnp.float32),   # bias filled as in __init__
        "layers": [],
    }
    for li in range(n_layers):
        k0, k1, k2, k3 = jax.random.split(ks[3 + li], 4)
        p["layers"].append({
            # value slice of in_proj (q/k slices have no effect at seq_len == 1)
            "wv_t": _xavier(k0, emb, emb).T,
            "bv": jnp.zeros((1, emb), jnp.float32),
            "wo_t": _xavier(k1, emb, emb).T,
            "bo": jnp.zeros((1, emb), jnp.float32),
            "w1_t": _xavier(k2, ff, emb).T,
            "b1": jnp.zeros((1, ff), jnp.float32),
            "w2_t": _xavier(k3, emb, ff).T,
            "b2": jnp.zeros((1, emb), jnp.float32),
            "g1": jnp.ones((1, emb), jnp.float32),
            "be1": jnp.zeros((1, emb), jnp.float32),
            "g2": jnp.ones((1, emb), jnp.float32),
            "be2": jnp.zeros((1, emb), jnp.float32),
        })
    return p


def prepare_pallas_params(raw, seq_len):
    """Fold the (linear) attention, stack/pack per-layer weights, precompute pe."""
    emb = raw["h1_t"].shape[0]
    layers = raw["layers"]
    ff = layers[0]["w1_t"].shape[1]
    width = max(emb, ff)

    def padrow(v):
        return jnp.pad(v, ((0, 0), (0, width - v.shape[1])))

    packed = []
    for lp in layers:
        b_attn = lp["bv"] @ lp["wo_t"] + lp["bo"]        # folded attention bias
        packed.append(jnp.concatenate(
            [padrow(b_attn), padrow(lp["b1"]), padrow(lp["b2"]),
             padrow(lp["g1"]), padrow(lp["be1"]),
             padrow(lp["g2"]), padrow(lp["be2"]),
             jnp.zeros((1, width), jnp.float32)], axis=0))   # (8, width)

    return {
        "pe": positional_encoding_table(seq_len, emb),
        "wa_t": raw["wa_t"], "ba": raw["ba"],
        # attention at seq_len==1 is linear: fold Wv·Wo (exact)
        "w_attn": jnp.stack([lp["wv_t"] @ lp["wo_t"] for lp in layers]),  # (L,E,E)
        "w1": jnp.stack([lp["w1_t"] for lp in layers]),                    # (L,E,FF)
        "w2": jnp.stack([lp["w2_t"] for lp in layers]),                    # (L,FF,E)
        "vecs": jnp.stack(packed),                                         # (L,8,W)
        "h1_t": raw["h1_t"], "hb1": raw["hb1"],
        "gn": raw["gn"], "bn": raw["bn"],
        "h2_row": raw["h2_row"], "hb2": raw["hb2"],
    }


# ----------------------------- forward wrapper --------------------------------

def pvt_audio_seq_pa_forward(prep, video_emb, audio_emb, patarget):
    if video_emb.ndim < 3:
        video_emb = video_emb[None]          # unsqueeze(0)
    # torch feeds (1, 2S, E) into the batch_first=False encoder => seq_len == 1;
    # the in-kernel attention simplification relies on this.
    assert video_emb.shape[0] == 1
    video = video_emb[0].astype(jnp.float32)             # (S, E)
    S, E = video.shape
    audio = audio_emb.astype(jnp.float32)                # (S, A)
    assert audio.shape[0] == S
    assert prep["pe"].shape == (S, E)

    # Pre-fold linear_2 bias + patarget + /3 into one lane-dense row (outside
    # the kernel; removes the (1,1) hb2 input and one broadcast-add).
    pa_row = ((patarget.astype(jnp.float32).reshape(1, S)
               + 2.0 * prep["hb2"][0, 0]) / 3.0)

    def vmem():
        return pl.BlockSpec(memory_space=pltpu.MemorySpace.VMEM)

    y, feat = pl.pallas_call(
        fused_forward_kernel,
        out_shape=(jax.ShapeDtypeStruct((1, S), jnp.float32),   # y (lane-dense)
                   jax.ShapeDtypeStruct((S, E), jnp.float32)),  # post-encoder xv
        in_specs=[vmem() for _ in range(15)],
        out_specs=(vmem(), vmem()),
        compiler_params=pltpu.CompilerParams(
            vmem_limit_bytes=32 * 1024 * 1024),
    )(video, audio,
      prep["wa_t"], prep["ba"], prep["pe"],
      prep["w_attn"], prep["w1"], prep["w2"], prep["vecs"],
      prep["h1_t"], prep["hb1"], prep["gn"], prep["bn"],
      prep["h2_row"], pa_row)

    return y[0], feat                        # == (y.squeeze(), video_emb)


# ----------------------------- pure-JAX reference ----------------------------

def reference_forward(params, video_emb, audio_emb, patarget):
    if video_emb.ndim < 3:
        video_emb = video_emb[None]
    video = video_emb[0]
    S, E = video.shape
    pe = positional_encoding_table(S, E)

    a = audio_emb @ params["wa_t"] + params["ba"]
    x = jnp.concatenate([video + pe, a + pe], axis=0)

    for lp in params["layers"]:
        v = x @ lp["wv_t"] + lp["bv"]
        attn = v @ lp["wo_t"] + lp["bo"]
        x = _layernorm(x + attn, lp["g1"], lp["be1"], 1e-5)
        h = jnp.maximum(x @ lp["w1_t"] + lp["b1"], 0.0)
        x = _layernorm(x + h @ lp["w2_t"] + lp["b2"], lp["g2"], lp["be2"], 1e-5)

    xv, xa = x[:S], x[S:]

    def branch(z):
        h = jnp.maximum(z @ params["h1_t"] + params["hb1"], 0.0)
        h = _layernorm(h, params["gn"], params["bn"], 1e-6)
        return h @ params["h2_row"].T + params["hb2"]

    y = (branch(xv) + branch(xa) + patarget.reshape(S, 1)) / 3.0
    return y[:, 0], xv


# ----------------------------- demo -------------------------------------------

if __name__ == "__main__":
    EMB, AUDIO, FF, LAYERS, S = 32, 64, 64, 2, 8

    key = jax.random.PRNGKey(0)
    kp, kv, ka, kt = jax.random.split(key, 4)
    raw_params = init_params(kp, EMB, AUDIO, FF, LAYERS)
    prep_params = prepare_pallas_params(raw_params, S)

    video_emb = jax.random.normal(kv, (S, EMB), jnp.float32)   # 2-D -> unsqueezed inside
    audio_emb = jax.random.normal(ka, (S, AUDIO), jnp.float32)
    patarget = jax.random.normal(kt, (S,), jnp.float32)

    y, feat = pvt_audio_seq_pa_forward(prep_params, video_emb, audio_emb, patarget)
    jax.block_until_ready((y, feat))

    y_ref, feat_ref = reference_forward(raw_params, video_emb, audio_emb, patarget)
    assert y.shape == (S,) and feat.shape == (S, EMB)
    assert jnp.allclose(y, y_ref, atol=2e-4, rtol=2e-4)
    assert jnp.allclose(feat, feat_ref, atol=2e-4, rtol=2e-4)

    print("KERNEL_OK")
</pallas_src>

<mosaic_0001>
module attributes {stable_mosaic.version = 11 : i64} {
  func.func @fused_forward_kernel(%arg0: memref<8x32xf32, #tpu.memory_space<vmem>>, %arg1: memref<8x64xf32, #tpu.memory_space<vmem>>, %arg2: memref<64x32xf32, #tpu.memory_space<vmem>>, %arg3: memref<1x32xf32, #tpu.memory_space<vmem>>, %arg4: memref<8x32xf32, #tpu.memory_space<vmem>>, %arg5: memref<2x32x32xf32, #tpu.memory_space<vmem>>, %arg6: memref<2x32x64xf32, #tpu.memory_space<vmem>>, %arg7: memref<2x64x32xf32, #tpu.memory_space<vmem>>, %arg8: memref<2x8x64xf32, #tpu.memory_space<vmem>>, %arg9: memref<32x32xf32, #tpu.memory_space<vmem>>, %arg10: memref<1x32xf32, #tpu.memory_space<vmem>>, %arg11: memref<1x32xf32, #tpu.memory_space<vmem>>, %arg12: memref<1x32xf32, #tpu.memory_space<vmem>>, %arg13: memref<1x32xf32, #tpu.memory_space<vmem>>, %arg14: memref<1x8xf32, #tpu.memory_space<vmem>>, %arg15: memref<1x8xf32, #tpu.memory_space<vmem>>, %arg16: memref<8x32xf32, #tpu.memory_space<vmem>>) attributes {dimension_semantics = [], scalar_prefetch = 0 : i64, scratch_operands = 0 : i64, tpu.core_type = #tpu.core_type<tc>} {
    %c0 = arith.constant 0 : index
    %c0_0 = arith.constant 0 : index
    %0 = vector.load %arg4[%c0, %c0_0] : memref<8x32xf32, #tpu.memory_space<vmem>>, vector<8x32xf32>
    %c0_1 = arith.constant 0 : index
    %c0_2 = arith.constant 0 : index
    %1 = vector.load %arg0[%c0_1, %c0_2] : memref<8x32xf32, #tpu.memory_space<vmem>>, vector<8x32xf32>
    %2 = arith.addf %1, %0 : vector<8x32xf32>
    %c0_3 = arith.constant 0 : index
    %c0_4 = arith.constant 0 : index
    %3 = vector.load %arg1[%c0_3, %c0_4] : memref<8x64xf32, #tpu.memory_space<vmem>>, vector<8x64xf32>
    %c0_5 = arith.constant 0 : index
    %c0_6 = arith.constant 0 : index
    %4 = vector.load %arg2[%c0_5, %c0_6] : memref<64x32xf32, #tpu.memory_space<vmem>>, vector<64x32xf32>
    %cst = arith.constant dense<0.000000e+00> : vector<8x32xf32>
    %5 = tpu.matmul %3, %4, %cst {dimension_numbers = #tpu.dot_dimension_numbers<[1], [0], [0], [1], [0, 0, 1, 1], [], []>} : vector<8x64xf32>, vector<64x32xf32>, vector<8x32xf32> -> vector<8x32xf32>
    %c0_7 = arith.constant 0 : index
    %c0_8 = arith.constant 0 : index
    %6 = vector.load %arg3[%c0_7, %c0_8] : memref<1x32xf32, #tpu.memory_space<vmem>>, vector<1x32xf32>
    %7 = vector.broadcast %6 : vector<1x32xf32> to vector<8x32xf32>
    %8 = arith.addf %5, %7 : vector<8x32xf32>
    %9 = arith.addf %8, %0 : vector<8x32xf32>
    %10 = tpu.concatenate %2, %9 in 0 : vector<8x32xf32>, vector<8x32xf32> -> vector<16x32xf32>
    %c0_9 = arith.constant 0 : index
    %c0_10 = arith.constant 0 : index
    %c0_11 = arith.constant 0 : index
    %11 = vector.load %arg8[%c0_9, %c0_10, %c0_11] : memref<2x8x64xf32, #tpu.memory_space<vmem>>, vector<1x8x64xf32>
    %12 = vector.shape_cast %11 : vector<1x8x64xf32> to vector<8x64xf32>
    %13 = vector.extract_strided_slice %12 {offsets = [0, 0], sizes = [1, 32], strides = [1, 1]} : vector<8x64xf32> to vector<1x32xf32>
    %14 = vector.extract_strided_slice %12 {offsets = [1, 0], sizes = [1, 64], strides = [1, 1]} : vector<8x64xf32> to vector<1x64xf32>
    %15 = vector.extract_strided_slice %12 {offsets = [2, 0], sizes = [1, 32], strides = [1, 1]} : vector<8x64xf32> to vector<1x32xf32>
    %16 = vector.extract_strided_slice %12 {offsets = [3, 0], sizes = [1, 32], strides = [1, 1]} : vector<8x64xf32> to vector<1x32xf32>
    %17 = vector.extract_strided_slice %12 {offsets = [4, 0], sizes = [1, 32], strides = [1, 1]} : vector<8x64xf32> to vector<1x32xf32>
    %18 = vector.extract_strided_slice %12 {offsets = [5, 0], sizes = [1, 32], strides = [1, 1]} : vector<8x64xf32> to vector<1x32xf32>
    %19 = vector.extract_strided_slice %12 {offsets = [6, 0], sizes = [1, 32], strides = [1, 1]} : vector<8x64xf32> to vector<1x32xf32>
    %c0_12 = arith.constant 0 : index
    %c0_13 = arith.constant 0 : index
    %c0_14 = arith.constant 0 : index
    %20 = vector.load %arg5[%c0_12, %c0_13, %c0_14] : memref<2x32x32xf32, #tpu.memory_space<vmem>>, vector<1x32x32xf32>
    %21 = vector.shape_cast %20 : vector<1x32x32xf32> to vector<32x32xf32>
    %cst_15 = arith.constant dense<0.000000e+00> : vector<16x32xf32>
    %22 = tpu.matmul %10, %21, %cst_15 {dimension_numbers = #tpu.dot_dimension_numbers<[1], [0], [0], [1], [0, 0, 1, 1], [], []>} : vector<16x32xf32>, vector<32x32xf32>, vector<16x32xf32> -> vector<16x32xf32>
    %23 = vector.broadcast %13 : vector<1x32xf32> to vector<16x32xf32>
    %24 = arith.addf %22, %23 : vector<16x32xf32>
    %25 = arith.addf %10, %24 : vector<16x32xf32>
    %cst_16 = arith.constant dense<0.000000e+00> : vector<16xf32>
    %26 = vector.multi_reduction <add>, %25, %cst_16 [1] : vector<16x32xf32> to vector<16xf32>
    %27 = vector.shape_cast %26 : vector<16xf32> to vector<16x1xf32>
    %cst_17 = arith.constant 3.200000e+01 : f32
    %28 = vector.broadcast %cst_17 : f32 to vector<16x1xf32>
    %29 = arith.divf %27, %28 : vector<16x1xf32>
    %30 = vector.broadcast %29 : vector<16x1xf32> to vector<16x32xf32>
    %31 = arith.subf %25, %30 : vector<16x32xf32>
    %32 = arith.mulf %31, %31 : vector<16x32xf32>
    %cst_18 = arith.constant dense<0.000000e+00> : vector<16xf32>
    %33 = vector.multi_reduction <add>, %32, %cst_18 [1] : vector<16x32xf32> to vector<16xf32>
    %34 = vector.shape_cast %33 : vector<16xf32> to vector<16x1xf32>
    %cst_19 = arith.constant 3.200000e+01 : f32
    %35 = vector.broadcast %cst_19 : f32 to vector<16x1xf32>
    %36 = arith.divf %34, %35 : vector<16x1xf32>
    %37 = vector.broadcast %29 : vector<16x1xf32> to vector<16x32xf32>
    %38 = arith.subf %25, %37 : vector<16x32xf32>
    %cst_20 = arith.constant 9.99999974E-6 : f32
    %39 = vector.broadcast %cst_20 : f32 to vector<16x1xf32>
    %40 = arith.addf %36, %39 : vector<16x1xf32>
    %41 = math.rsqrt %40 : vector<16x1xf32>
    %42 = vector.broadcast %41 : vector<16x1xf32> to vector<16x32xf32>
    %43 = arith.mulf %38, %42 : vector<16x32xf32>
    %44 = vector.broadcast %16 : vector<1x32xf32> to vector<16x32xf32>
    %45 = arith.mulf %43, %44 : vector<16x32xf32>
    %46 = vector.broadcast %17 : vector<1x32xf32> to vector<16x32xf32>
    %47 = arith.addf %45, %46 : vector<16x32xf32>
    %c0_21 = arith.constant 0 : index
    %c0_22 = arith.constant 0 : index
    %c0_23 = arith.constant 0 : index
    %48 = vector.load %arg6[%c0_21, %c0_22, %c0_23] : memref<2x32x64xf32, #tpu.memory_space<vmem>>, vector<1x32x64xf32>
    %49 = vector.shape_cast %48 : vector<1x32x64xf32> to vector<32x64xf32>
    %cst_24 = arith.constant dense<0.000000e+00> : vector<16x64xf32>
    %50 = tpu.matmul %47, %49, %cst_24 {dimension_numbers = #tpu.dot_dimension_numbers<[1], [0], [0], [1], [0, 0, 1, 1], [], []>} : vector<16x32xf32>, vector<32x64xf32>, vector<16x64xf32> -> vector<16x64xf32>
    %51 = vector.broadcast %14 : vector<1x64xf32> to vector<16x64xf32>
    %52 = arith.addf %50, %51 : vector<16x64xf32>
    %cst_25 = arith.constant 0.000000e+00 : f32
    %53 = vector.broadcast %cst_25 : f32 to vector<16x64xf32>
    %54 = arith.maximumf %52, %53 : vector<16x64xf32>
    %c0_26 = arith.constant 0 : index
    %c0_27 = arith.constant 0 : index
    %c0_28 = arith.constant 0 : index
    %55 = vector.load %arg7[%c0_26, %c0_27, %c0_28] : memref<2x64x32xf32, #tpu.memory_space<vmem>>, vector<1x64x32xf32>
    %56 = vector.shape_cast %55 : vector<1x64x32xf32> to vector<64x32xf32>
    %cst_29 = arith.constant dense<0.000000e+00> : vector<16x32xf32>
    %57 = tpu.matmul %54, %56, %cst_29 {dimension_numbers = #tpu.dot_dimension_numbers<[1], [0], [0], [1], [0, 0, 1, 1], [], []>} : vector<16x64xf32>, vector<64x32xf32>, vector<16x32xf32> -> vector<16x32xf32>
    %58 = vector.broadcast %15 : vector<1x32xf32> to vector<16x32xf32>
    %59 = arith.addf %57, %58 : vector<16x32xf32>
    %60 = arith.addf %47, %59 : vector<16x32xf32>
    %cst_30 = arith.constant dense<0.000000e+00> : vector<16xf32>
    %61 = vector.multi_reduction <add>, %60, %cst_30 [1] : vector<16x32xf32> to vector<16xf32>
    %62 = vector.shape_cast %61 : vector<16xf32> to vector<16x1xf32>
    %cst_31 = arith.constant 3.200000e+01 : f32
    %63 = vector.broadcast %cst_31 : f32 to vector<16x1xf32>
    %64 = arith.divf %62, %63 : vector<16x1xf32>
    %65 = vector.broadcast %64 : vector<16x1xf32> to vector<16x32xf32>
    %66 = arith.subf %60, %65 : vector<16x32xf32>
    %67 = arith.mulf %66, %66 : vector<16x32xf32>
    %cst_32 = arith.constant dense<0.000000e+00> : vector<16xf32>
    %68 = vector.multi_reduction <add>, %67, %cst_32 [1] : vector<16x32xf32> to vector<16xf32>
    %69 = vector.shape_cast %68 : vector<16xf32> to vector<16x1xf32>
    %cst_33 = arith.constant 3.200000e+01 : f32
    %70 = vector.broadcast %cst_33 : f32 to vector<16x1xf32>
    %71 = arith.divf %69, %70 : vector<16x1xf32>
    %72 = vector.broadcast %64 : vector<16x1xf32> to vector<16x32xf32>
    %73 = arith.subf %60, %72 : vector<16x32xf32>
    %cst_34 = arith.constant 9.99999974E-6 : f32
    %74 = vector.broadcast %cst_34 : f32 to vector<16x1xf32>
    %75 = arith.addf %71, %74 : vector<16x1xf32>
    %76 = math.rsqrt %75 : vector<16x1xf32>
    %77 = vector.broadcast %76 : vector<16x1xf32> to vector<16x32xf32>
    %78 = arith.mulf %73, %77 : vector<16x32xf32>
    %79 = vector.broadcast %18 : vector<1x32xf32> to vector<16x32xf32>
    %80 = arith.mulf %78, %79 : vector<16x32xf32>
    %81 = vector.broadcast %19 : vector<1x32xf32> to vector<16x32xf32>
    %82 = arith.addf %80, %81 : vector<16x32xf32>
    %c1 = arith.constant 1 : index
    %c0_35 = arith.constant 0 : index
    %c0_36 = arith.constant 0 : index
    %83 = vector.load %arg8[%c1, %c0_35, %c0_36] : memref<2x8x64xf32, #tpu.memory_space<vmem>>, vector<1x8x64xf32>
    %84 = vector.shape_cast %83 : vector<1x8x64xf32> to vector<8x64xf32>
    %85 = vector.extract_strided_slice %84 {offsets = [0, 0], sizes = [1, 32], strides = [1, 1]} : vector<8x64xf32> to vector<1x32xf32>
    %86 = vector.extract_strided_slice %84 {offsets = [1, 0], sizes = [1, 64], strides = [1, 1]} : vector<8x64xf32> to vector<1x64xf32>
    %87 = vector.extract_strided_slice %84 {offsets = [2, 0], sizes = [1, 32], strides = [1, 1]} : vector<8x64xf32> to vector<1x32xf32>
    %88 = vector.extract_strided_slice %84 {offsets = [3, 0], sizes = [1, 32], strides = [1, 1]} : vector<8x64xf32> to vector<1x32xf32>
    %89 = vector.extract_strided_slice %84 {offsets = [4, 0], sizes = [1, 32], strides = [1, 1]} : vector<8x64xf32> to vector<1x32xf32>
    %90 = vector.extract_strided_slice %84 {offsets = [5, 0], sizes = [1, 32], strides = [1, 1]} : vector<8x64xf32> to vector<1x32xf32>
    %91 = vector.extract_strided_slice %84 {offsets = [6, 0], sizes = [1, 32], strides = [1, 1]} : vector<8x64xf32> to vector<1x32xf32>
    %c1_37 = arith.constant 1 : index
    %c0_38 = arith.constant 0 : index
    %c0_39 = arith.constant 0 : index
    %92 = vector.load %arg5[%c1_37, %c0_38, %c0_39] : memref<2x32x32xf32, #tpu.memory_space<vmem>>, vector<1x32x32xf32>
    %93 = vector.shape_cast %92 : vector<1x32x32xf32> to vector<32x32xf32>
    %cst_40 = arith.constant dense<0.000000e+00> : vector<16x32xf32>
    %94 = tpu.matmul %82, %93, %cst_40 {dimension_numbers = #tpu.dot_dimension_numbers<[1], [0], [0], [1], [0, 0, 1, 1], [], []>} : vector<16x32xf32>, vector<32x32xf32>, vector<16x32xf32> -> vector<16x32xf32>
    %95 = vector.broadcast %85 : vector<1x32xf32> to vector<16x32xf32>
    %96 = arith.addf %94, %95 : vector<16x32xf32>
    %97 = arith.addf %82, %96 : vector<16x32xf32>
    %cst_41 = arith.constant dense<0.000000e+00> : vector<16xf32>
    %98 = vector.multi_reduction <add>, %97, %cst_41 [1] : vector<16x32xf32> to vector<16xf32>
    %99 = vector.shape_cast %98 : vector<16xf32> to vector<16x1xf32>
    %cst_42 = arith.constant 3.200000e+01 : f32
    %100 = vector.broadcast %cst_42 : f32 to vector<16x1xf32>
    %101 = arith.divf %99, %100 : vector<16x1xf32>
    %102 = vector.broadcast %101 : vector<16x1xf32> to vector<16x32xf32>
    %103 = arith.subf %97, %102 : vector<16x32xf32>
    %104 = arith.mulf %103, %103 : vector<16x32xf32>
    %cst_43 = arith.constant dense<0.000000e+00> : vector<16xf32>
    %105 = vector.multi_reduction <add>, %104, %cst_43 [1] : vector<16x32xf32> to vector<16xf32>
    %106 = vector.shape_cast %105 : vector<16xf32> to vector<16x1xf32>
    %cst_44 = arith.constant 3.200000e+01 : f32
    %107 = vector.broadcast %cst_44 : f32 to vector<16x1xf32>
    %108 = arith.divf %106, %107 : vector<16x1xf32>
    %109 = vector.broadcast %101 : vector<16x1xf32> to vector<16x32xf32>
    %110 = arith.subf %97, %109 : vector<16x32xf32>
    %cst_45 = arith.constant 9.99999974E-6 : f32
    %111 = vector.broadcast %cst_45 : f32 to vector<16x1xf32>
    %112 = arith.addf %108, %111 : vector<16x1xf32>
    %113 = math.rsqrt %112 : vector<16x1xf32>
    %114 = vector.broadcast %113 : vector<16x1xf32> to vector<16x32xf32>
    %115 = arith.mulf %110, %114 : vector<16x32xf32>
    %116 = vector.broadcast %88 : vector<1x32xf32> to vector<16x32xf32>
    %117 = arith.mulf %115, %116 : vector<16x32xf32>
    %118 = vector.broadcast %89 : vector<1x32xf32> to vector<16x32xf32>
    %119 = arith.addf %117, %118 : vector<16x32xf32>
    %c1_46 = arith.constant 1 : index
    %c0_47 = arith.constant 0 : index
    %c0_48 = arith.constant 0 : index
    %120 = vector.load %arg6[%c1_46, %c0_47, %c0_48] : memref<2x32x64xf32, #tpu.memory_space<vmem>>, vector<1x32x64xf32>
    %121 = vector.shape_cast %120 : vector<1x32x64xf32> to vector<32x64xf32>
    %cst_49 = arith.constant dense<0.000000e+00> : vector<16x64xf32>
    %122 = tpu.matmul %119, %121, %cst_49 {dimension_numbers = #tpu.dot_dimension_numbers<[1], [0], [0], [1], [0, 0, 1, 1], [], []>} : vector<16x32xf32>, vector<32x64xf32>, vector<16x64xf32> -> vector<16x64xf32>
    %123 = vector.broadcast %86 : vector<1x64xf32> to vector<16x64xf32>
    %124 = arith.addf %122, %123 : vector<16x64xf32>
    %cst_50 = arith.constant 0.000000e+00 : f32
    %125 = vector.broadcast %cst_50 : f32 to vector<16x64xf32>
    %126 = arith.maximumf %124, %125 : vector<16x64xf32>
    %c1_51 = arith.constant 1 : index
    %c0_52 = arith.constant 0 : index
    %c0_53 = arith.constant 0 : index
    %127 = vector.load %arg7[%c1_51, %c0_52, %c0_53] : memref<2x64x32xf32, #tpu.memory_space<vmem>>, vector<1x64x32xf32>
    %128 = vector.shape_cast %127 : vector<1x64x32xf32> to vector<64x32xf32>
    %cst_54 = arith.constant dense<0.000000e+00> : vector<16x32xf32>
    %129 = tpu.matmul %126, %128, %cst_54 {dimension_numbers = #tpu.dot_dimension_numbers<[1], [0], [0], [1], [0, 0, 1, 1], [], []>} : vector<16x64xf32>, vector<64x32xf32>, vector<16x32xf32> -> vector<16x32xf32>
    %130 = vector.broadcast %87 : vector<1x32xf32> to vector<16x32xf32>
    %131 = arith.addf %129, %130 : vector<16x32xf32>
    %132 = arith.addf %119, %131 : vector<16x32xf32>
    %cst_55 = arith.constant dense<0.000000e+00> : vector<16xf32>
    %133 = vector.multi_reduction <add>, %132, %cst_55 [1] : vector<16x32xf32> to vector<16xf32>
    %134 = vector.shape_cast %133 : vector<16xf32> to vector<16x1xf32>
    %cst_56 = arith.constant 3.200000e+01 : f32
    %135 = vector.broadcast %cst_56 : f32 to vector<16x1xf32>
    %136 = arith.divf %134, %135 : vector<16x1xf32>
    %137 = vector.broadcast %136 : vector<16x1xf32> to vector<16x32xf32>
    %138 = arith.subf %132, %137 : vector<16x32xf32>
    %139 = arith.mulf %138, %138 : vector<16x32xf32>
    %cst_57 = arith.constant dense<0.000000e+00> : vector<16xf32>
    %140 = vector.multi_reduction <add>, %139, %cst_57 [1] : vector<16x32xf32> to vector<16xf32>
    %141 = vector.shape_cast %140 : vector<16xf32> to vector<16x1xf32>
    %cst_58 = arith.constant 3.200000e+01 : f32
    %142 = vector.broadcast %cst_58 : f32 to vector<16x1xf32>
    %143 = arith.divf %141, %142 : vector<16x1xf32>
    %144 = vector.broadcast %136 : vector<16x1xf32> to vector<16x32xf32>
    %145 = arith.subf %132, %144 : vector<16x32xf32>
    %cst_59 = arith.constant 9.99999974E-6 : f32
    %146 = vector.broadcast %cst_59 : f32 to vector<16x1xf32>
    %147 = arith.addf %143, %146 : vector<16x1xf32>
    %148 = math.rsqrt %147 : vector<16x1xf32>
    %149 = vector.broadcast %148 : vector<16x1xf32> to vector<16x32xf32>
    %150 = arith.mulf %145, %149 : vector<16x32xf32>
    %151 = vector.broadcast %90 : vector<1x32xf32> to vector<16x32xf32>
    %152 = arith.mulf %150, %151 : vector<16x32xf32>
    %153 = vector.broadcast %91 : vector<1x32xf32> to vector<16x32xf32>
    %154 = arith.addf %152, %153 : vector<16x32xf32>
    %c0_60 = arith.constant 0 : index
    %c0_61 = arith.constant 0 : index
    %155 = vector.load %arg9[%c0_60, %c0_61] : memref<32x32xf32, #tpu.memory_space<vmem>>, vector<32x32xf32>
    %cst_62 = arith.constant dense<0.000000e+00> : vector<16x32xf32>
    %156 = tpu.matmul %154, %155, %cst_62 {dimension_numbers = #tpu.dot_dimension_numbers<[1], [0], [0], [1], [0, 0, 1, 1], [], []>} : vector<16x32xf32>, vector<32x32xf32>, vector<16x32xf32> -> vector<16x32xf32>
    %c0_63 = arith.constant 0 : index
    %c0_64 = arith.constant 0 : index
    %157 = vector.load %arg10[%c0_63, %c0_64] : memref<1x32xf32, #tpu.memory_space<vmem>>, vector<1x32xf32>
    %158 = vector.broadcast %157 : vector<1x32xf32> to vector<16x32xf32>
    %159 = arith.addf %156, %158 : vector<16x32xf32>
    %cst_65 = arith.constant 0.000000e+00 : f32
    %160 = vector.broadcast %cst_65 : f32 to vector<16x32xf32>
    %161 = arith.maximumf %159, %160 : vector<16x32xf32>
    %c0_66 = arith.constant 0 : index
    %c0_67 = arith.constant 0 : index
    %162 = vector.load %arg11[%c0_66, %c0_67] : memref<1x32xf32, #tpu.memory_space<vmem>>, vector<1x32xf32>
    %c0_68 = arith.constant 0 : index
    %c0_69 = arith.constant 0 : index
    %163 = vector.load %arg12[%c0_68, %c0_69] : memref<1x32xf32, #tpu.memory_space<vmem>>, vector<1x32xf32>
    %cst_70 = arith.constant dense<0.000000e+00> : vector<16xf32>
    %164 = vector.multi_reduction <add>, %161, %cst_70 [1] : vector<16x32xf32> to vector<16xf32>
    %165 = vector.shape_cast %164 : vector<16xf32> to vector<16x1xf32>
    %cst_71 = arith.constant 3.200000e+01 : f32
    %166 = vector.broadcast %cst_71 : f32 to vector<16x1xf32>
    %167 = arith.divf %165, %166 : vector<16x1xf32>
    %168 = vector.broadcast %167 : vector<16x1xf32> to vector<16x32xf32>
    %169 = arith.subf %161, %168 : vector<16x32xf32>
    %170 = arith.mulf %169, %169 : vector<16x32xf32>
    %cst_72 = arith.constant dense<0.000000e+00> : vector<16xf32>
    %171 = vector.multi_reduction <add>, %170, %cst_72 [1] : vector<16x32xf32> to vector<16xf32>
    %172 = vector.shape_cast %171 : vector<16xf32> to vector<16x1xf32>
    %cst_73 = arith.constant 3.200000e+01 : f32
    %173 = vector.broadcast %cst_73 : f32 to vector<16x1xf32>
    %174 = arith.divf %172, %173 : vector<16x1xf32>
    %175 = vector.broadcast %167 : vector<16x1xf32> to vector<16x32xf32>
    %176 = arith.subf %161, %175 : vector<16x32xf32>
    %cst_74 = arith.constant 9.99999997E-7 : f32
    %177 = vector.broadcast %cst_74 : f32 to vector<16x1xf32>
    %178 = arith.addf %174, %177 : vector<16x1xf32>
    %179 = math.rsqrt %178 : vector<16x1xf32>
    %180 = vector.broadcast %179 : vector<16x1xf32> to vector<16x32xf32>
    %181 = arith.mulf %176, %180 : vector<16x32xf32>
    %182 = vector.broadcast %162 : vector<1x32xf32> to vector<16x32xf32>
    %183 = arith.mulf %181, %182 : vector<16x32xf32>
    %184 = vector.broadcast %163 : vector<1x32xf32> to vector<16x32xf32>
    %185 = arith.addf %183, %184 : vector<16x32xf32>
    %186 = vector.extract_strided_slice %185 {offsets = [0, 0], sizes = [8, 32], strides = [1, 1]} : vector<16x32xf32> to vector<8x32xf32>
    %187 = vector.extract_strided_slice %185 {offsets = [8, 0], sizes = [8, 32], strides = [1, 1]} : vector<16x32xf32> to vector<8x32xf32>
    %188 = arith.addf %186, %187 : vector<8x32xf32>
    %c0_75 = arith.constant 0 : index
    %c0_76 = arith.constant 0 : index
    %189 = vector.load %arg13[%c0_75, %c0_76] : memref<1x32xf32, #tpu.memory_space<vmem>>, vector<1x32xf32>
    %cst_77 = arith.constant dense<0.000000e+00> : vector<1x8xf32>
    %190 = tpu.matmul %189, %188, %cst_77 {dimension_numbers = #tpu.dot_dimension_numbers<[1], [1], [0], [0], [0, 0, 1, 0], [], []>} : vector<1x32xf32>, vector<8x32xf32>, vector<1x8xf32> -> vector<1x8xf32>
    %cst_78 = arith.constant 0.333333343 : f32
    %191 = vector.broadcast %cst_78 : f32 to vector<1x8xf32>
    %192 = arith.mulf %190, %191 : vector<1x8xf32>
    %c0_79 = arith.constant 0 : index
    %c0_80 = arith.constant 0 : index
    %193 = vector.load %arg14[%c0_79, %c0_80] : memref<1x8xf32, #tpu.memory_space<vmem>>, vector<1x8xf32>
    %194 = arith.addf %192, %193 : vector<1x8xf32>
    %c0_81 = arith.constant 0 : index
    %c0_82 = arith.constant 0 : index
    %195 = vector.load %arg15[%c0_81, %c0_82] : memref<1x8xf32, #tpu.memory_space<vmem>>, vector<1x8xf32>
    tpu.vector_store %arg15[%c0_81, %c0_82], %194 {strides = array<i32>} : memref<1x8xf32, #tpu.memory_space<vmem>>, vector<1x8xf32>,
    %196 = vector.extract_strided_slice %154 {offsets = [0, 0], sizes = [8, 32], strides = [1, 1]} : vector<16x32xf32> to vector<8x32xf32>
    %c0_83 = arith.constant 0 : index
    %c0_84 = arith.constant 0 : index
    %197 = vector.load %arg16[%c0_83, %c0_84] : memref<8x32xf32, #tpu.memory_space<vmem>>, vector<8x32xf32>
    tpu.vector_store %arg16[%c0_83, %c0_84], %196 {strides = array<i32>} : memref<8x32xf32, #tpu.memory_space<vmem>>, vector<8x32xf32>,
    return
  }
}

</mosaic_0001>

<llo_original>
// kernel: tpu_custom_call.1
$region0: #{tpu_custom_call.1}
  #allocation0 [shape = 'u32[]', space=smem, size = 0x4, offset = 0x4, fixed_abs, tag = 'smem constant byte address 0x4 - core index']
  #allocation1 [shape = 'u32[144,128]{1,0:T(1,128)}', space=vmem, size = 0x12000, scoped, tag = 'internal scratch']
  %s0 = inlined_call_operand.vmem [shape: f32[8,32], index: 0, kind: input, shape index: {}]
  %s1 = inlined_call_operand.vmem [shape: f32[8,64], index: 1, kind: input, shape index: {}]
  %s2 = inlined_call_operand.vmem [shape: f32[64,32], index: 2, kind: input, shape index: {}]
  %s3 = inlined_call_operand.vmem [shape: f32[1,32], index: 3, kind: input, shape index: {}]
  %s4 = inlined_call_operand.vmem [shape: f32[8,32], index: 4, kind: input, shape index: {}]
  %s5 = inlined_call_operand.vmem [shape: f32[2,32,32], index: 5, kind: input, shape index: {}]
  %s6 = inlined_call_operand.vmem [shape: f32[2,32,64], index: 6, kind: input, shape index: {}]
  %s7 = inlined_call_operand.vmem [shape: f32[2,64,32], index: 7, kind: input, shape index: {}]
  %s8 = inlined_call_operand.vmem [shape: f32[2,8,64], index: 8, kind: input, shape index: {}]
  %s9 = inlined_call_operand.vmem [shape: f32[32,32], index: 9, kind: input, shape index: {}]
  %s10 = inlined_call_operand.vmem [shape: f32[1,32], index: 10, kind: input, shape index: {}]
  %s11 = inlined_call_operand.vmem [shape: f32[1,32], index: 11, kind: input, shape index: {}]
  %s12 = inlined_call_operand.vmem [shape: f32[1,32], index: 12, kind: input, shape index: {}]
  %s13 = inlined_call_operand.vmem [shape: f32[1,32], index: 13, kind: input, shape index: {}]
  %s14 = inlined_call_operand.vmem [shape: f32[1,8], index: 14, kind: input, shape index: {}]
  %s15 = inlined_call_operand.hbm [shape: f32[1,8], index: 15, kind: output, shape index: {0}]
  %s16 = inlined_call_operand.hbm [shape: f32[8,32], index: 16, kind: output, shape index: {1}]
  %17 = xla_tuple %s15, %s16
  %s18 = sld [smem:[#allocation0]]
  $region78: #{tpu_custom_call.1} parent=0
    _
  %s20 = ssub.s32 1, %s18
  %s21 = scalar_select 0, %s20, %s18
  $region1: #{tpu_custom_call.1} parent=0
    #allocation2 [shape = 'u8[512]{0}', space=vmem, size = 0x400, scoped, tag = 'output window, operand 0, single buffered']
    #allocation3 [shape = 's32[1]{0}', space=sflag, size = 0x4, scoped, tag = 'scoped memory for tpu_custom_call.1']
    #allocation4 [shape = 'u8[4096]{0}', space=vmem, size = 0x1000, scoped, tag = 'output window, operand 1, single buffered']
    #allocation5 [shape = 's32[1]{0}', space=sflag, size = 0x4, scoped, tag = 'scoped memory for tpu_custom_call.1']
    %22 = vsyncpa [#allocation3], 0
    %23 = vsyncpa [#allocation5], 0
    // Predicated region
    $region2: #{tpu_custom_call.1} parent=1 // pred_check
      _
    $region3: #{tpu_custom_call.1} parent=1 // pred_check_branch
      %25 = sbr.rel (0) target = $region5
    $region4: #{tpu_custom_call.1} parent=1 // pred_region
      _
    $region5: #{tpu_custom_call.1} parent=1 // pred_fallthru
      _
    // Predicated region
    $region6: #{tpu_custom_call.1} parent=1 // pred_check
      _
    $region7: #{tpu_custom_call.1} parent=1 // pred_check_branch
      %27 = sbr.rel (0) target = $region9
    $region8: #{tpu_custom_call.1} parent=1 // pred_region
      _
    $region9: #{tpu_custom_call.1} parent=1 // pred_fallthru
      _
    // Predicated region
    $region10: #{tpu_custom_call.1} parent=1 // pred_check
      _
    $region11: #{tpu_custom_call.1} parent=1 // pred_check_branch
      %29 = sbr.rel (0) target = $region13
    $region12: #{tpu_custom_call.1} parent=1 // pred_region
      _
    $region13: #{tpu_custom_call.1} parent=1 // pred_fallthru
      _
    // Predicated region
    $region14: #{tpu_custom_call.1} parent=1 // pred_check
      _
    $region15: #{tpu_custom_call.1} parent=1 // pred_check_branch
      %31 = sbr.rel (0) target = $region17
    $region16: #{tpu_custom_call.1} parent=1 // pred_region
      _
    $region17: #{tpu_custom_call.1} parent=1 // pred_fallthru
      _
    // Predicated region
    $region18: #{tpu_custom_call.1} parent=1 // pred_check
      _
    $region19: #{tpu_custom_call.1} parent=1 // pred_check_branch
      %33 = sbr.rel (0) target = $region21
    $region20: #{tpu_custom_call.1} parent=1 // pred_region
      _
    $region21: #{tpu_custom_call.1} parent=1 // pred_fallthru
      _
    // Predicated region
    $region22: #{tpu_custom_call.1} parent=1 // pred_check
      _
    $region23: #{tpu_custom_call.1} parent=1 // pred_check_branch
      %35 = sbr.rel (0) target = $region25
    $region24: #{tpu_custom_call.1} parent=1 // pred_region
      _
    $region25: #{tpu_custom_call.1} parent=1 // pred_fallthru
      _
    // Predicated region
    $region26: #{tpu_custom_call.1} parent=1 // pred_check
      _
    $region27: #{tpu_custom_call.1} parent=1 // pred_check_branch
      %37 = sbr.rel (0) target = $region29
    $region28: #{tpu_custom_call.1} parent=1 // pred_region
      _
    $region29: #{tpu_custom_call.1} parent=1 // pred_fallthru
      _
    // Predicated region
    $region30: #{tpu_custom_call.1} parent=1 // pred_check
      _
    $region31: #{tpu_custom_call.1} parent=1 // pred_check_branch
      %39 = sbr.rel (0) target = $region33
    $region32: #{tpu_custom_call.1} parent=1 // pred_region
      _
    $region33: #{tpu_custom_call.1} parent=1 // pred_fallthru
      _
    // Predicated region
    $region34: #{tpu_custom_call.1} parent=1 // pred_check
      _
    $region35: #{tpu_custom_call.1} parent=1 // pred_check_branch
      %41 = sbr.rel (0) target = $region37
    $region36: #{tpu_custom_call.1} parent=1 // pred_region
      _
    $region37: #{tpu_custom_call.1} parent=1 // pred_fallthru
      _
    // Predicated region
    $region38: #{tpu_custom_call.1} parent=1 // pred_check
      _
    $region39: #{tpu_custom_call.1} parent=1 // pred_check_branch
      %43 = sbr.rel (0) target = $region41
    $region40: #{tpu_custom_call.1} parent=1 // pred_region
      _
    $region41: #{tpu_custom_call.1} parent=1 // pred_fallthru
      _
    // Predicated region
    $region42: #{tpu_custom_call.1} parent=1 // pred_check
      _
    $region43: #{tpu_custom_call.1} parent=1 // pred_check_branch
      %45 = sbr.rel (0) target = $region45
    $region44: #{tpu_custom_call.1} parent=1 // pred_region
      _
    $region45: #{tpu_custom_call.1} parent=1 // pred_fallthru
      _
    // Predicated region
    $region46: #{tpu_custom_call.1} parent=1 // pred_check
      _
    $region47: #{tpu_custom_call.1} parent=1 // pred_check_branch
      %47 = sbr.rel (0) target = $region49
    $region48: #{tpu_custom_call.1} parent=1 // pred_region
      _
    $region49: #{tpu_custom_call.1} parent=1 // pred_fallthru
      _
    // Predicated region
    $region50: #{tpu_custom_call.1} parent=1 // pred_check
      _
    $region51: #{tpu_custom_call.1} parent=1 // pred_check_branch
      %49 = sbr.rel (0) target = $region53
    $region52: #{tpu_custom_call.1} parent=1 // pred_region
      _
    $region53: #{tpu_custom_call.1} parent=1 // pred_fallthru
      _
    // Predicated region
    $region54: #{tpu_custom_call.1} parent=1 // pred_check
      _
    $region55: #{tpu_custom_call.1} parent=1 // pred_check_branch
      %51 = sbr.rel (0) target = $region57
    $region56: #{tpu_custom_call.1} parent=1 // pred_region
      _
    $region57: #{tpu_custom_call.1} parent=1 // pred_fallthru
      _
    // Predicated region
    $region58: #{tpu_custom_call.1} parent=1 // pred_check
      _
    $region59: #{tpu_custom_call.1} parent=1 // pred_check_branch
      %53 = sbr.rel (0) target = $region61
    $region60: #{tpu_custom_call.1} parent=1 // pred_region
      _
    $region61: #{tpu_custom_call.1} parent=1 // pred_fallthru
      _
    %v54 = vld [vmem:[%s4] sm:$0xff]
    %v55 = vld [vmem:[%s0] sm:$0xff]
    %v56 = vadd.f32 %v55, %v54
    %v57 = vld [vmem:[%s1] sm:$0xff]
    %v58 = vld [vmem:[%s2] sm:$0xff]
    %v59 = vld [vmem:[%s2 + $0x8] sm:$0xff]
    %v60 = vld [vmem:[%s2 + $0x10] sm:$0xff]
    %v61 = vld [vmem:[%s2 + $0x18] sm:$0xff]
    %v62 = vld [vmem:[%s2 + $0x20] sm:$0xff]
    %v63 = vld [vmem:[%s2 + $0x28] sm:$0xff]
    %v64 = vld [vmem:[%s2 + $0x30] sm:$0xff]
    %v65 = vld [vmem:[%s2 + $0x38] sm:$0xff]
    %v66 = vld [vmem:[%s3] sm:$0x1]
    %v68 = vlaneseq
    %v69 = vshrl.u32 %v68, 7
    %v70 = vsub.s32 0, %v69
    %v71 = vrot.slane %v66, %v70
    %vm73 = vcmask 523264
    %v75 = vsel %vm73, %v57, 0
    %77 = vmatprep.subr.mxu0 0.0
    %78 = vmatpush1.msra.mxu0 0.0
    %79 = vmatprep.subr.mxu0 0.0
    %80 = vmatpush1.msra.mxu0 0.0
    %81 = vmatprep.subr.mxu0 0.0
    %82 = vmatpush1.msra.mxu0 0.0
    %83 = vmatprep.subr.mxu0 0.0
    %84 = vmatpush1.msra.mxu0 0.0
    %85 = vmatprep.subr.mxu0 0.0
    %86 = vmatpush1.msra.mxu0 0.0
    %87 = vmatprep.subr.mxu0 0.0
    %88 = vmatpush1.msra.mxu0 0.0
    %89 = vmatprep.subr.mxu0 0.0
    %90 = vmatpush1.msra.mxu0 0.0
    %91 = vmatprep.subr.mxu0 0.0
    %92 = vmatpush1.msra.mxu0 0.0
    %93 = vmatprep.subr.mxu0 0.0
    %94 = vmatpush1.msra.mxu0 %v65
    %95 = vmatprep.subr.mxu0 0.0
    %96 = vmatpush1.msra.mxu0 %v64
    %97 = vmatprep.subr.mxu0 0.0
    %98 = vmatpush1.msra.mxu0 %v63
    %99 = vmatprep.subr.mxu0 0.0
    %100 = vmatpush1.msra.mxu0 %v62
    %101 = vmatprep.subr.mxu0 0.0
    %102 = vmatpush1.msra.mxu0 %v61
    %103 = vmatprep.subr.mxu0 0.0
    %104 = vmatpush1.msra.mxu0 %v60
    %105 = vmatprep.subr.mxu0 0.0
    %106 = vmatpush1.msra.mxu0 %v59
    %107 = vmatprep.subr.mxu0 0.0
    %108 = vmatpush1.msra.mxu0 %v58
    %109 = vmatprep.subr.mxu0 0.0
    %110 = vmatpush2.msra.mxu0 0.0
    %111 = vmatprep.subr.mxu0 0.0
    %112 = vmatpush2.msra.mxu0 0.0
    %113 = vmatprep.subr.mxu0 0.0
    %114 = vmatpush2.msra.mxu0 0.0
    %115 = vmatprep.subr.mxu0 0.0
    %116 = vmatpush2.msra.mxu0 0.0
    %117 = vmatprep.subr.mxu0 0.0
    %118 = vmatpush2.msra.mxu0 0.0
    %119 = vmatprep.subr.mxu0 0.0
    %120 = vmatpush2.msra.mxu0 0.0
    %121 = vmatprep.subr.mxu0 0.0
    %122 = vmatpush2.msra.mxu0 0.0
    %123 = vmatprep.subr.mxu0 0.0
    %124 = vmatpush2.msra.mxu0 0.0
    %125 = vmatprep.subr.mxu0 0.0
    %126 = vmatpush2.msra.mxu0 0.0
    %127 = vmatprep.subr.mxu0 0.0
    %128 = vmatpush2.msra.mxu0 0.0
    %129 = vmatprep.subr.mxu0 0.0
    %130 = vmatpush2.msra.mxu0 0.0
    %131 = vmatprep.subr.mxu0 0.0
    %132 = vmatpush2.msra.mxu0 0.0
    %133 = vmatprep.subr.mxu0 0.0
    %134 = vmatpush2.msra.mxu0 0.0
    %135 = vmatprep.subr.mxu0 0.0
    %136 = vmatpush2.msra.mxu0 0.0
    %137 = vmatprep.subr.mxu0 0.0
    %138 = vmatpush2.msra.mxu0 0.0
    %139 = vmatprep.subr.mxu0 0.0
    %140 = vmatpush2.msra.mxu0 0.0
    %141 = vmatprep.mubr.f32.mxu0 0.0
    %142 = vmatmul.mubr.f32.gmra.mxu0 %v75
    %v143 = vpop.f32.mrf.mxu0
    %v144 = vadd.f32 %v71, %v143
    %v145 = vpop.f32.mrf.mxu0
    %146 = vdwg.mxu0
    %v147 = vadd.f32 %v144, %v54
    %v148 = vld [vmem:[%s8] sm:$0xff]
    %v149 = vld [vmem:[%s5] sm:$0xff]
    %v150 = vld [vmem:[%s5 + $0x8] sm:$0xff]
    %v151 = vld [vmem:[%s5 + $0x10] sm:$0xff]
    %v152 = vld [vmem:[%s5 + $0x18] sm:$0xff]
    %v153 = vlaneseq
    %v154 = vshrl.u32 %v153, 7
    %v155 = vsub.s32 0, %v154
    %v156 = vrot.slane %v148, %v155
    %vm157 = vcmask 261120
    %v159 = vsel %vm157, %v56, 0
    %v162 = vsel %vm157, %v147, 0
    %164 = vmatprep.subr.mxu0 0.0
    %165 = vmatpush1.msra.mxu0 0.0
    %166 = vmatprep.subr.mxu0 0.0
    %167 = vmatpush1.msra.mxu0 0.0
    %168 = vmatprep.subr.mxu0 0.0
    %169 = vmatpush1.msra.mxu0 0.0
    %170 = vmatprep.subr.mxu0 0.0
    %171 = vmatpush1.msra.mxu0 0.0
    %172 = vmatprep.subr.mxu0 0.0
    %173 = vmatpush1.msra.mxu0 0.0
    %174 = vmatprep.subr.mxu0 0.0
    %175 = vmatpush1.msra.mxu0 0.0
    %176 = vmatprep.subr.mxu0 0.0
    %177 = vmatpush1.msra.mxu0 0.0
    %178 = vmatprep.subr.mxu0 0.0
    %179 = vmatpush1.msra.mxu0 0.0
    %180 = vmatprep.subr.mxu0 0.0
    %181 = vmatpush1.msra.mxu0 0.0
    %182 = vmatprep.subr.mxu0 0.0
    %183 = vmatpush1.msra.mxu0 0.0
    %184 = vmatprep.subr.mxu0 0.0
    %185 = vmatpush1.msra.mxu0 0.0
    %186 = vmatprep.subr.mxu0 0.0
    %187 = vmatpush1.msra.mxu0 0.0
    %188 = vmatprep.subr.mxu0 0.0
    %189 = vmatpush1.msra.mxu0 %v152
    %190 = vmatprep.subr.mxu0 0.0
    %191 = vmatpush1.msra.mxu0 %v151
    %192 = vmatprep.subr.mxu0 0.0
    %193 = vmatpush1.msra.mxu0 %v150
    %194 = vmatprep.subr.mxu0 0.0
    %195 = vmatpush1.msra.mxu0 %v149
    %196 = vmatprep.subr.mxu0 0.0
    %197 = vmatpush2.msra.mxu0 0.0
    %198 = vmatprep.subr.mxu0 0.0
    %199 = vmatpush2.msra.mxu0 0.0
    %200 = vmatprep.subr.mxu0 0.0
    %201 = vmatpush2.msra.mxu0 0.0
    %202 = vmatprep.subr.mxu0 0.0
    %203 = vmatpush2.msra.mxu0 0.0
    %204 = vmatprep.subr.mxu0 0.0
    %205 = vmatpush2.msra.mxu0 0.0
    %206 = vmatprep.subr.mxu0 0.0
    %207 = vmatpush2.msra.mxu0 0.0
    %208 = vmatprep.subr.mxu0 0.0
    %209 = vmatpush2.msra.mxu0 0.0
    %210 = vmatprep.subr.mxu0 0.0
    %211 = vmatpush2.msra.mxu0 0.0
    %212 = vmatprep.subr.mxu0 0.0
    %213 = vmatpush2.msra.mxu0 0.0
    %214 = vmatprep.subr.mxu0 0.0
    %215 = vmatpush2.msra.mxu0 0.0
    %216 = vmatprep.subr.mxu0 0.0
    %217 = vmatpush2.msra.mxu0 0.0
    %218 = vmatprep.subr.mxu0 0.0
    %219 = vmatpush2.msra.mxu0 0.0
    %220 = vmatprep.subr.mxu0 0.0
    %221 = vmatpush2.msra.mxu0 0.0
    %222 = vmatprep.subr.mxu0 0.0
    %223 = vmatpush2.msra.mxu0 0.0
    %224 = vmatprep.subr.mxu0 0.0
    %225 = vmatpush2.msra.mxu0 0.0
    %226 = vmatprep.subr.mxu0 0.0
    %227 = vmatpush2.msra.mxu0 0.0
    %228 = vmatprep.mubr.f32.mxu0 0.0
    %229 = vmatmul.mubr.f32.gmra.mxu0 %v159
    %v230 = vpop.f32.mrf.mxu0
    %v231 = vadd.f32 %v156, %v230
    %v232 = vpop.f32.mrf.mxu0
    %233 = vmatprep.mubr.f32.mxu0 0.0
    %234 = vmatmul.mubr.f32.gmra.mxu0 %v162
    %v235 = vpop.f32.mrf.mxu0
    %v236 = vadd.f32 %v156, %v235
    %v237 = vpop.f32.mrf.mxu0
    %238 = vdwg.mxu0
    %v239 = vadd.f32 %v56, %v231
    %v240 = vadd.f32 %v147, %v236
    %v241 = vsel %vm157, %v239, 0.0
    %242 = vadd.xlane.f32.xlu0 %v241
    %v243 = vpop.xlane.xlu0 %242
    %v244 = vsel %vm157, %v240, 0.0
    %245 = vadd.xlane.f32.xlu0 %v244
    %v246 = vpop.xlane.xlu0 %245
    %v247 = vrcp.pop 32.0
    %v248 = vmul.f32 %v243, %v247
    %v249 = vmul.f32 %v246, %v247
    %v250 = vsub.f32 %v239, %v248
    %v251 = vsub.f32 %v240, %v249
    %v252 = vmul.f32 %v250, %v250
    %v253 = vmul.f32 %v251, %v251
    %v254 = vsel %vm157, %v252, 0.0
    %255 = vadd.xlane.f32.xlu0 %v254
    %v256 = vpop.xlane.xlu0 %255
    %v257 = vsel %vm157, %v253, 0.0
    %258 = vadd.xlane.f32.xlu0 %v257
    %v259 = vpop.xlane.xlu0 %258
    %v260 = vmul.f32 %v256, %v247
    %v261 = vmul.f32 %v259, %v247
    %v262 = vadd.f32 %v260, 1e-05
    %v263 = vadd.f32 %v261, 1e-05
    %v264 = vrsqrt.pop %v262
    %v265 = vrsqrt.pop %v263
    %v266 = vmul.f32 %v250, %v264
    %v267 = vmul.f32 %v251, %v265
    %v268 = vlaneseq
    %v269 = vshrl.u32 %v268, 7
    %v270 = vsub.s32 3, %v269
    %v271 = vrot.slane %v148, %v270
    %v272 = vmul.f32 %v266, %v271
    %v273 = vmul.f32 %v267, %v271
    %v274 = vlaneseq
    %v275 = vshrl.u32 %v274, 7
    %v276 = vsub.s32 4, %v275
    %v277 = vrot.slane %v148, %v276
    %v278 = vadd.f32 %v272, %v277
    %v279 = vadd.f32 %v273, %v277
    %v280 = vld [vmem:[%s6] sm:$0xff]
    %v281 = vld [vmem:[%s6 + $0x8] sm:$0xff]
    %v282 = vld [vmem:[%s6 + $0x10] sm:$0xff]
    %v283 = vld [vmem:[%s6 + $0x18] sm:$0xff]
    %v284 = vlaneseq
    %v285 = vshrl.u32 %v284, 7
    %v286 = vsub.s32 1, %v285
    %v287 = vrot.slane %v148, %v286
    %v289 = vsel %vm157, %v278, 0
    %v292 = vsel %vm157, %v279, 0
    %294 = vmatprep.subr.mxu0 0.0
    %295 = vmatpush1.msra.mxu0 0.0
    %296 = vmatprep.subr.mxu0 0.0
    %297 = vmatpush1.msra.mxu0 0.0
    %298 = vmatprep.subr.mxu0 0.0
    %299 = vmatpush1.msra.mxu0 0.0
    %300 = vmatprep.subr.mxu0 0.0
    %301 = vmatpush1.msra.mxu0 0.0
    %302 = vmatprep.subr.mxu0 0.0
    %303 = vmatpush1.msra.mxu0 0.0
    %304 = vmatprep.subr.mxu0 0.0
    %305 = vmatpush1.msra.mxu0 0.0
    %306 = vmatprep.subr.mxu0 0.0
    %307 = vmatpush1.msra.mxu0 0.0
    %308 = vmatprep.subr.mxu0 0.0
    %309 = vmatpush1.msra.mxu0 0.0
    %310 = vmatprep.subr.mxu0 0.0
    %311 = vmatpush1.msra.mxu0 0.0
    %312 = vmatprep.subr.mxu0 0.0
    %313 = vmatpush1.msra.mxu0 0.0
    %314 = vmatprep.subr.mxu0 0.0
    %315 = vmatpush1.msra.mxu0 0.0
    %316 = vmatprep.subr.mxu0 0.0
    %317 = vmatpush1.msra.mxu0 0.0
    %318 = vmatprep.subr.mxu0 0.0
    %319 = vmatpush1.msra.mxu0 %v283
    %320 = vmatprep.subr.mxu0 0.0
    %321 = vmatpush1.msra.mxu0 %v282
    %322 = vmatprep.subr.mxu0 0.0
    %323 = vmatpush1.msra.mxu0 %v281
    %324 = vmatprep.subr.mxu0 0.0
    %325 = vmatpush1.msra.mxu0 %v280
    %326 = vmatprep.subr.mxu0 0.0
    %327 = vmatpush2.msra.mxu0 0.0
    %328 = vmatprep.subr.mxu0 0.0
    %329 = vmatpush2.msra.mxu0 0.0
    %330 = vmatprep.subr.mxu0 0.0
    %331 = vmatpush2.msra.mxu0 0.0
    %332 = vmatprep.subr.mxu0 0.0
    %333 = vmatpush2.msra.mxu0 0.0
    %334 = vmatprep.subr.mxu0 0.0
    %335 = vmatpush2.msra.mxu0 0.0
    %336 = vmatprep.subr.mxu0 0.0
    %337 = vmatpush2.msra.mxu0 0.0
    %338 = vmatprep.subr.mxu0 0.0
    %339 = vmatpush2.msra.mxu0 0.0
    %340 = vmatprep.subr.mxu0 0.0
    %341 = vmatpush2.msra.mxu0 0.0
    %342 = vmatprep.subr.mxu0 0.0
    %343 = vmatpush2.msra.mxu0 0.0
    %344 = vmatprep.subr.mxu0 0.0
    %345 = vmatpush2.msra.mxu0 0.0
    %346 = vmatprep.subr.mxu0 0.0
    %347 = vmatpush2.msra.mxu0 0.0
    %348 = vmatprep.subr.mxu0 0.0
    %349 = vmatpush2.msra.mxu0 0.0
    %350 = vmatprep.subr.mxu0 0.0
    %351 = vmatpush2.msra.mxu0 0.0
    %352 = vmatprep.subr.mxu0 0.0
    %353 = vmatpush2.msra.mxu0 0.0
    %354 = vmatprep.subr.mxu0 0.0
    %355 = vmatpush2.msra.mxu0 0.0
    %356 = vmatprep.subr.mxu0 0.0
    %357 = vmatpush2.msra.mxu0 0.0
    %358 = vmatprep.mubr.f32.mxu0 0.0
    %359 = vmatmul.mubr.f32.gmra.mxu0 %v289
    %v360 = vpop.f32.mrf.mxu0
    %v361 = vadd.f32 %v287, %v360
    %v362 = vpop.f32.mrf.mxu0
    %363 = vmatprep.mubr.f32.mxu0 0.0
    %364 = vmatmul.mubr.f32.gmra.mxu0 %v292
    %v365 = vpop.f32.mrf.mxu0
    %v366 = vadd.f32 %v287, %v365
    %v367 = vpop.f32.mrf.mxu0
    %368 = vdwg.mxu0
    %v369 = vmax.f32 %v361, 0.0
    %v370 = vmax.f32 %v366, 0.0
    %v371 = vld [vmem:[%s7] sm:$0xff]
    %v372 = vld [vmem:[%s7 + $0x8] sm:$0xff]
    %v373 = vld [vmem:[%s7 + $0x10] sm:$0xff]
    %v374 = vld [vmem:[%s7 + $0x18] sm:$0xff]
    %v375 = vld [vmem:[%s7 + $0x20] sm:$0xff]
    %v376 = vld [vmem:[%s7 + $0x28] sm:$0xff]
    %v377 = vld [vmem:[%s7 + $0x30] sm:$0xff]
    %v378 = vld [vmem:[%s7 + $0x38] sm:$0xff]
    %v379 = vlaneseq
    %v380 = vshrl.u32 %v379, 7
    %v381 = vsub.s32 2, %v380
    %v382 = vrot.slane %v148, %v381
    %v384 = vsel %vm73, %v369, 0
    %v387 = vsel %vm73, %v370, 0
    %389 = vmatprep.subr.mxu0 0.0
    %390 = vmatpush1.msra.mxu0 0.0
    %391 = vmatprep.subr.mxu0 0.0
    %392 = vmatpush1.msra.mxu0 0.0
    %393 = vmatprep.subr.mxu0 0.0
    %394 = vmatpush1.msra.mxu0 0.0
    %395 = vmatprep.subr.mxu0 0.0
    %396 = vmatpush1.msra.mxu0 0.0
    %397 = vmatprep.subr.mxu0 0.0
    %398 = vmatpush1.msra.mxu0 0.0
    %399 = vmatprep.subr.mxu0 0.0
    %400 = vmatpush1.msra.mxu0 0.0
    %401 = vmatprep.subr.mxu0 0.0
    %402 = vmatpush1.msra.mxu0 0.0
    %403 = vmatprep.subr.mxu0 0.0
    %404 = vmatpush1.msra.mxu0 0.0
    %405 = vmatprep.subr.mxu0 0.0
    %406 = vmatpush1.msra.mxu0 %v378
    %407 = vmatprep.subr.mxu0 0.0
    %408 = vmatpush1.msra.mxu0 %v377
    %409 = vmatprep.subr.mxu0 0.0
    %410 = vmatpush1.msra.mxu0 %v376
    %411 = vmatprep.subr.mxu0 0.0
    %412 = vmatpush1.msra.mxu0 %v375
    %413 = vmatprep.subr.mxu0 0.0
    %414 = vmatpush1.msra.mxu0 %v374
    %415 = vmatprep.subr.mxu0 0.0
    %416 = vmatpush1.msra.mxu0 %v373
    %417 = vmatprep.subr.mxu0 0.0
    %418 = vmatpush1.msra.mxu0 %v372
    %419 = vmatprep.subr.mxu0 0.0
    %420 = vmatpush1.msra.mxu0 %v371
    %421 = vmatprep.subr.mxu0 0.0
    %422 = vmatpush2.msra.mxu0 0.0
    %423 = vmatprep.subr.mxu0 0.0
    %424 = vmatpush2.msra.mxu0 0.0
    %425 = vmatprep.subr.mxu0 0.0
    %426 = vmatpush2.msra.mxu0 0.0
    %427 = vmatprep.subr.mxu0 0.0
    %428 = vmatpush2.msra.mxu0 0.0
    %429 = vmatprep.subr.mxu0 0.0
    %430 = vmatpush2.msra.mxu0 0.0
    %431 = vmatprep.subr.mxu0 0.0
    %432 = vmatpush2.msra.mxu0 0.0
    %433 = vmatprep.subr.mxu0 0.0
    %434 = vmatpush2.msra.mxu0 0.0
    %435 = vmatprep.subr.mxu0 0.0
    %436 = vmatpush2.msra.mxu0 0.0
    %437 = vmatprep.subr.mxu0 0.0
    %438 = vmatpush2.msra.mxu0 0.0
    %439 = vmatprep.subr.mxu0 0.0
    %440 = vmatpush2.msra.mxu0 0.0
    %441 = vmatprep.subr.mxu0 0.0
    %442 = vmatpush2.msra.mxu0 0.0
    %443 = vmatprep.subr.mxu0 0.0
    %444 = vmatpush2.msra.mxu0 0.0
    %445 = vmatprep.subr.mxu0 0.0
    %446 = vmatpush2.msra.mxu0 0.0
    %447 = vmatprep.subr.mxu0 0.0
    %448 = vmatpush2.msra.mxu0 0.0
    %449 = vmatprep.subr.mxu0 0.0
    %450 = vmatpush2.msra.mxu0 0.0
    %451 = vmatprep.subr.mxu0 0.0
    %452 = vmatpush2.msra.mxu0 0.0
    %453 = vmatprep.mubr.f32.mxu0 0.0
    %454 = vmatmul.mubr.f32.gmra.mxu0 %v384
    %v455 = vpop.f32.mrf.mxu0
    %v456 = vadd.f32 %v382, %v455
    %v457 = vpop.f32.mrf.mxu0
    %458 = vmatprep.mubr.f32.mxu0 0.0
    %459 = vmatmul.mubr.f32.gmra.mxu0 %v387
    %v460 = vpop.f32.mrf.mxu0
    %v461 = vadd.f32 %v382, %v460
    %v462 = vpop.f32.mrf.mxu0
    %463 = vdwg.mxu0
    %v464 = vadd.f32 %v278, %v456
    %v465 = vadd.f32 %v279, %v461
    %v466 = vsel %vm157, %v464, 0.0
    %467 = vadd.xlane.f32.xlu0 %v466
    %v468 = vpop.xlane.xlu0 %467
    %v469 = vsel %vm157, %v465, 0.0
    %470 = vadd.xlane.f32.xlu0 %v469
    %v471 = vpop.xlane.xlu0 %470
    %v472 = vmul.f32 %v468, %v247
    %v473 = vmul.f32 %v471, %v247
    %v474 = vsub.f32 %v464, %v472
    %v475 = vsub.f32 %v465, %v473
    %v476 = vmul.f32 %v474, %v474
    %v477 = vmul.f32 %v475, %v475
    %v478 = vsel %vm157, %v476, 0.0
    %479 = vadd.xlane.f32.xlu0 %v478
    %v480 = vpop.xlane.xlu0 %479
    %v481 = vsel %vm157, %v477, 0.0
    %482 = vadd.xlane.f32.xlu0 %v481
    %v483 = vpop.xlane.xlu0 %482
    %v484 = vmul.f32 %v480, %v247
    %v485 = vmul.f32 %v483, %v247
    %v486 = vadd.f32 %v484, 1e-05
    %v487 = vadd.f32 %v485, 1e-05
    %v488 = vrsqrt.pop %v486
    %v489 = vrsqrt.pop %v487
    %v490 = vmul.f32 %v474, %v488
    %v491 = vmul.f32 %v475, %v489
    %v492 = vlaneseq
    %v493 = vshrl.u32 %v492, 7
    %v494 = vsub.s32 5, %v493
    %v495 = vrot.slane %v148, %v494
    %v496 = vmul.f32 %v490, %v495
    %v497 = vmul.f32 %v491, %v495
    %v498 = vlaneseq
    %v499 = vshrl.u32 %v498, 7
    %v500 = vsub.s32 6, %v499
    %v501 = vrot.slane %v148, %v500
    %v502 = vadd.f32 %v496, %v501
    %v503 = vadd.f32 %v497, %v501
    %s504 = scalar_lea.vmem %s8, 8
    %v505 = vld [vmem:[%s504] sm:$0xff]
    %s506 = scalar_lea.vmem %s5, 32
    %v507 = vld [vmem:[%s506] sm:$0xff]
    %v508 = vld [vmem:[%s506 + $0x8] sm:$0xff]
    %v509 = vld [vmem:[%s506 + $0x10] sm:$0xff]
    %v510 = vld [vmem:[%s506 + $0x18] sm:$0xff]
    %v511 = vlaneseq
    %v512 = vshrl.u32 %v511, 7
    %v513 = vsub.s32 0, %v512
    %v514 = vrot.slane %v505, %v513
    %v516 = vsel %vm157, %v502, 0
    %v519 = vsel %vm157, %v503, 0
    %521 = vmatprep.subr.mxu0 0.0
    %522 = vmatpush1.msra.mxu0 0.0
    %523 = vmatprep.subr.mxu0 0.0
    %524 = vmatpush1.msra.mxu0 0.0
    %525 = vmatprep.subr.mxu0 0.0
    %526 = vmatpush1.msra.mxu0 0.0
    %527 = vmatprep.subr.mxu0 0.0
    %528 = vmatpush1.msra.mxu0 0.0
    %529 = vmatprep.subr.mxu0 0.0
    %530 = vmatpush1.msra.mxu0 0.0
    %531 = vmatprep.subr.mxu0 0.0
    %532 = vmatpush1.msra.mxu0 0.0
    %533 = vmatprep.subr.mxu0 0.0
    %534 = vmatpush1.msra.mxu0 0.0
    %535 = vmatprep.subr.mxu0 0.0
    %536 = vmatpush1.msra.mxu0 0.0
    %537 = vmatprep.subr.mxu0 0.0
    %538 = vmatpush1.msra.mxu0 0.0
    %539 = vmatprep.subr.mxu0 0.0
    %540 = vmatpush1.msra.mxu0 0.0
    %541 = vmatprep.subr.mxu0 0.0
    %542 = vmatpush1.msra.mxu0 0.0
    %543 = vmatprep.subr.mxu0 0.0
    %544 = vmatpush1.msra.mxu0 0.0
    %545 = vmatprep.subr.mxu0 0.0
    %546 = vmatpush1.msra.mxu0 %v510
    %547 = vmatprep.subr.mxu0 0.0
    %548 = vmatpush1.msra.mxu0 %v509
    %549 = vmatprep.subr.mxu0 0.0
    %550 = vmatpush1.msra.mxu0 %v508
    %551 = vmatprep.subr.mxu0 0.0
    %552 = vmatpush1.msra.mxu0 %v507
    %553 = vmatprep.subr.mxu0 0.0
    %554 = vmatpush2.msra.mxu0 0.0
    %555 = vmatprep.subr.mxu0 0.0
    %556 = vmatpush2.msra.mxu0 0.0
    %557 = vmatprep.subr.mxu0 0.0
    %558 = vmatpush2.msra.mxu0 0.0
    %559 = vmatprep.subr.mxu0 0.0
    %560 = vmatpush2.msra.mxu0 0.0
    %561 = vmatprep.subr.mxu0 0.0
    %562 = vmatpush2.msra.mxu0 0.0
    %563 = vmatprep.subr.mxu0 0.0
    %564 = vmatpush2.msra.mxu0 0.0
    %565 = vmatprep.subr.mxu0 0.0
    %566 = vmatpush2.msra.mxu0 0.0
    %567 = vmatprep.subr.mxu0 0.0
    %568 = vmatpush2.msra.mxu0 0.0
    %569 = vmatprep.subr.mxu0 0.0
    %570 = vmatpush2.msra.mxu0 0.0
    %571 = vmatprep.subr.mxu0 0.0
    %572 = vmatpush2.msra.mxu0 0.0
    %573 = vmatprep.subr.mxu0 0.0
    %574 = vmatpush2.msra.mxu0 0.0
    %575 = vmatprep.subr.mxu0 0.0
    %576 = vmatpush2.msra.mxu0 0.0
    %577 = vmatprep.subr.mxu0 0.0
    %578 = vmatpush2.msra.mxu0 0.0
    %579 = vmatprep.subr.mxu0 0.0
    %580 = vmatpush2.msra.mxu0 0.0
    %581 = vmatprep.subr.mxu0 0.0
    %582 = vmatpush2.msra.mxu0 0.0
    %583 = vmatprep.subr.mxu0 0.0
    %584 = vmatpush2.msra.mxu0 0.0
    %585 = vmatprep.mubr.f32.mxu0 0.0
    %586 = vmatmul.mubr.f32.gmra.mxu0 %v516
    %v587 = vpop.f32.mrf.mxu0
    %v588 = vadd.f32 %v514, %v587
    %v589 = vpop.f32.mrf.mxu0
    %590 = vmatprep.mubr.f32.mxu0 0.0
    %591 = vmatmul.mubr.f32.gmra.mxu0 %v519
    %v592 = vpop.f32.mrf.mxu0
    %v593 = vadd.f32 %v514, %v592
    %v594 = vpop.f32.mrf.mxu0
    %595 = vdwg.mxu0
    %v596 = vadd.f32 %v502, %v588
    %v597 = vadd.f32 %v503, %v593
    %v598 = vsel %vm157, %v596, 0.0
    %599 = vadd.xlane.f32.xlu0 %v598
    %v600 = vpop.xlane.xlu0 %599
    %v601 = vsel %vm157, %v597, 0.0
    %602 = vadd.xlane.f32.xlu0 %v601
    %v603 = vpop.xlane.xlu0 %602
    %v604 = vmul.f32 %v600, %v247
    %v605 = vmul.f32 %v603, %v247
    %v606 = vsub.f32 %v596, %v604
    %v607 = vsub.f32 %v597, %v605
    %v608 = vmul.f32 %v606, %v606
    %v609 = vmul.f32 %v607, %v607
    %v610 = vsel %vm157, %v608, 0.0
    %611 = vadd.xlane.f32.xlu0 %v610
    %v612 = vpop.xlane.xlu0 %611
    %v613 = vsel %vm157, %v609, 0.0
    %614 = vadd.xlane.f32.xlu0 %v613
    %v615 = vpop.xlane.xlu0 %614
    %v616 = vmul.f32 %v612, %v247
    %v617 = vmul.f32 %v615, %v247
    %v618 = vadd.f32 %v616, 1e-05
    %v619 = vadd.f32 %v617, 1e-05
    %v620 = vrsqrt.pop %v618
    %v621 = vrsqrt.pop %v619
    %v622 = vmul.f32 %v606, %v620
    %v623 = vmul.f32 %v607, %v621
    %v624 = vlaneseq
    %v625 = vshrl.u32 %v624, 7
    %v626 = vsub.s32 3, %v625
    %v627 = vrot.slane %v505, %v626
    %v628 = vmul.f32 %v622, %v627
    %v629 = vmul.f32 %v623, %v627
    %v630 = vlaneseq
    %v631 = vshrl.u32 %v630, 7
    %v632 = vsub.s32 4, %v631
    %v633 = vrot.slane %v505, %v632
    %v634 = vadd.f32 %v628, %v633
    %v635 = vadd.f32 %v629, %v633
    %s636 = scalar_lea.vmem %s6, 32
    %v637 = vld [vmem:[%s636] sm:$0xff]
    %v638 = vld [vmem:[%s636 + $0x8] sm:$0xff]
    %v639 = vld [vmem:[%s636 + $0x10] sm:$0xff]
    %v640 = vld [vmem:[%s636 + $0x18] sm:$0xff]
    %v641 = vlaneseq
    %v642 = vshrl.u32 %v641, 7
    %v643 = vsub.s32 1, %v642
    %v644 = vrot.slane %v505, %v643
    %v646 = vsel %vm157, %v634, 0
    %v649 = vsel %vm157, %v635, 0
    %651 = vmatprep.subr.mxu0 0.0
    %652 = vmatpush1.msra.mxu0 0.0
    %653 = vmatprep.subr.mxu0 0.0
    %654 = vmatpush1.msra.mxu0 0.0
    %655 = vmatprep.subr.mxu0 0.0
    %656 = vmatpush1.msra.mxu0 0.0
    %657 = vmatprep.subr.mxu0 0.0
    %658 = vmatpush1.msra.mxu0 0.0
    %659 = vmatprep.subr.mxu0 0.0
    %660 = vmatpush1.msra.mxu0 0.0
    %661 = vmatprep.subr.mxu0 0.0
    %662 = vmatpush1.msra.mxu0 0.0
    %663 = vmatprep.subr.mxu0 0.0
    %664 = vmatpush1.msra.mxu0 0.0
    %665 = vmatprep.subr.mxu0 0.0
    %666 = vmatpush1.msra.mxu0 0.0
    %667 = vmatprep.subr.mxu0 0.0
    %668 = vmatpush1.msra.mxu0 0.0
    %669 = vmatprep.subr.mxu0 0.0
    %670 = vmatpush1.msra.mxu0 0.0
    %671 = vmatprep.subr.mxu0 0.0
    %672 = vmatpush1.msra.mxu0 0.0
    %673 = vmatprep.subr.mxu0 0.0
    %674 = vmatpush1.msra.mxu0 0.0
    %675 = vmatprep.subr.mxu0 0.0
    %676 = vmatpush1.msra.mxu0 %v640
    %677 = vmatprep.subr.mxu0 0.0
    %678 = vmatpush1.msra.mxu0 %v639
    %679 = vmatprep.subr.mxu0 0.0
    %680 = vmatpush1.msra.mxu0 %v638
    %681 = vmatprep.subr.mxu0 0.0
    %682 = vmatpush1.msra.mxu0 %v637
    %683 = vmatprep.subr.mxu0 0.0
    %684 = vmatpush2.msra.mxu0 0.0
    %685 = vmatprep.subr.mxu0 0.0
    %686 = vmatpush2.msra.mxu0 0.0
    %687 = vmatprep.subr.mxu0 0.0
    %688 = vmatpush2.msra.mxu0 0.0
    %689 = vmatprep.subr.mxu0 0.0
    %690 = vmatpush2.msra.mxu0 0.0
    %691 = vmatprep.subr.mxu0 0.0
    %692 = vmatpush2.msra.mxu0 0.0
    %693 = vmatprep.subr.mxu0 0.0
    %694 = vmatpush2.msra.mxu0 0.0
    %695 = vmatprep.subr.mxu0 0.0
    %696 = vmatpush2.msra.mxu0 0.0
    %697 = vmatprep.subr.mxu0 0.0
    %698 = vmatpush2.msra.mxu0 0.0
    %699 = vmatprep.subr.mxu0 0.0
    %700 = vmatpush2.msra.mxu0 0.0
    %701 = vmatprep.subr.mxu0 0.0
    %702 = vmatpush2.msra.mxu0 0.0
    %703 = vmatprep.subr.mxu0 0.0
    %704 = vmatpush2.msra.mxu0 0.0
    %705 = vmatprep.subr.mxu0 0.0
    %706 = vmatpush2.msra.mxu0 0.0
    %707 = vmatprep.subr.mxu0 0.0
    %708 = vmatpush2.msra.mxu0 0.0
    %709 = vmatprep.subr.mxu0 0.0
    %710 = vmatpush2.msra.mxu0 0.0
    %711 = vmatprep.subr.mxu0 0.0
    %712 = vmatpush2.msra.mxu0 0.0
    %713 = vmatprep.subr.mxu0 0.0
    %714 = vmatpush2.msra.mxu0 0.0
    %715 = vmatprep.mubr.f32.mxu0 0.0
    %716 = vmatmul.mubr.f32.gmra.mxu0 %v646
    %v717 = vpop.f32.mrf.mxu0
    %v718 = vadd.f32 %v644, %v717
    %v719 = vpop.f32.mrf.mxu0
    %720 = vmatprep.mubr.f32.mxu0 0.0
    %721 = vmatmul.mubr.f32.gmra.mxu0 %v649
    %v722 = vpop.f32.mrf.mxu0
    %v723 = vadd.f32 %v644, %v722
    %v724 = vpop.f32.mrf.mxu0
    %725 = vdwg.mxu0
    %v726 = vmax.f32 %v718, 0.0
    %v727 = vmax.f32 %v723, 0.0
    %s728 = scalar_lea.vmem %s7, 64
    %v729 = vld [vmem:[%s728] sm:$0xff]
    %v730 = vld [vmem:[%s728 + $0x8] sm:$0xff]
    %v731 = vld [vmem:[%s728 + $0x10] sm:$0xff]
    %v732 = vld [vmem:[%s728 + $0x18] sm:$0xff]
    %v733 = vld [vmem:[%s728 + $0x20] sm:$0xff]
    %v734 = vld [vmem:[%s728 + $0x28] sm:$0xff]
    %v735 = vld [vmem:[%s728 + $0x30] sm:$0xff]
    %v736 = vld [vmem:[%s728 + $0x38] sm:$0xff]
    %v737 = vlaneseq
    %v738 = vshrl.u32 %v737, 7
    %v739 = vsub.s32 2, %v738
    %v740 = vrot.slane %v505, %v739
    %v742 = vsel %vm73, %v726, 0
    %v745 = vsel %vm73, %v727, 0
    %747 = vmatprep.subr.mxu0 0.0
    %748 = vmatpush1.msra.mxu0 0.0
    %749 = vmatprep.subr.mxu0 0.0
    %750 = vmatpush1.msra.mxu0 0.0
    %751 = vmatprep.subr.mxu0 0.0
    %752 = vmatpush1.msra.mxu0 0.0
    %753 = vmatprep.subr.mxu0 0.0
    %754 = vmatpush1.msra.mxu0 0.0
    %755 = vmatprep.subr.mxu0 0.0
    %756 = vmatpush1.msra.mxu0 0.0
    %757 = vmatprep.subr.mxu0 0.0
    %758 = vmatpush1.msra.mxu0 0.0
    %759 = vmatprep.subr.mxu0 0.0
    %760 = vmatpush1.msra.mxu0 0.0
    %761 = vmatprep.subr.mxu0 0.0
    %762 = vmatpush1.msra.mxu0 0.0
    %763 = vmatprep.subr.mxu0 0.0
    %764 = vmatpush1.msra.mxu0 %v736
    %765 = vmatprep.subr.mxu0 0.0
    %766 = vmatpush1.msra.mxu0 %v735
    %767 = vmatprep.subr.mxu0 0.0
    %768 = vmatpush1.msra.mxu0 %v734
    %769 = vmatprep.subr.mxu0 0.0
    %770 = vmatpush1.msra.mxu0 %v733
    %771 = vmatprep.subr.mxu0 0.0
    %772 = vmatpush1.msra.mxu0 %v732
    %773 = vmatprep.subr.mxu0 0.0
    %774 = vmatpush1.msra.mxu0 %v731
    %775 = vmatprep.subr.mxu0 0.0
    %776 = vmatpush1.msra.mxu0 %v730
    %777 = vmatprep.subr.mxu0 0.0
    %778 = vmatpush1.msra.mxu0 %v729
    %779 = vmatprep.subr.mxu0 0.0
    %780 = vmatpush2.msra.mxu0 0.0
    %781 = vmatprep.subr.mxu0 0.0
    %782 = vmatpush2.msra.mxu0 0.0
    %783 = vmatprep.subr.mxu0 0.0
    %784 = vmatpush2.msra.mxu0 0.0
    %785 = vmatprep.subr.mxu0 0.0
    %786 = vmatpush2.msra.mxu0 0.0
    %787 = vmatprep.subr.mxu0 0.0
    %788 = vmatpush2.msra.mxu0 0.0
    %789 = vmatprep.subr.mxu0 0.0
    %790 = vmatpush2.msra.mxu0 0.0
    %791 = vmatprep.subr.mxu0 0.0
    %792 = vmatpush2.msra.mxu0 0.0
    %793 = vmatprep.subr.mxu0 0.0
    %794 = vmatpush2.msra.mxu0 0.0
    %795 = vmatprep.subr.mxu0 0.0
    %796 = vmatpush2.msra.mxu0 0.0
    %797 = vmatprep.subr.mxu0 0.0
    %798 = vmatpush2.msra.mxu0 0.0
    %799 = vmatprep.subr.mxu0 0.0
    %800 = vmatpush2.msra.mxu0 0.0
    %801 = vmatprep.subr.mxu0 0.0
    %802 = vmatpush2.msra.mxu0 0.0
    %803 = vmatprep.subr.mxu0 0.0
    %804 = vmatpush2.msra.mxu0 0.0
    %805 = vmatprep.subr.mxu0 0.0
    %806 = vmatpush2.msra.mxu0 0.0
    %807 = vmatprep.subr.mxu0 0.0
    %808 = vmatpush2.msra.mxu0 0.0
    %809 = vmatprep.subr.mxu0 0.0
    %810 = vmatpush2.msra.mxu0 0.0
    %811 = vmatprep.mubr.f32.mxu0 0.0
    %812 = vmatmul.mubr.f32.gmra.mxu0 %v742
    %v813 = vpop.f32.mrf.mxu0
    %v814 = vadd.f32 %v740, %v813
    %v815 = vpop.f32.mrf.mxu0
    %816 = vmatprep.mubr.f32.mxu0 0.0
    %817 = vmatmul.mubr.f32.gmra.mxu0 %v745
    %v818 = vpop.f32.mrf.mxu0
    %v819 = vadd.f32 %v740, %v818
    %v820 = vpop.f32.mrf.mxu0
    %821 = vdwg.mxu0
    %v822 = vadd.f32 %v634, %v814
    %v823 = vadd.f32 %v635, %v819
    %v824 = vsel %vm157, %v822, 0.0
    %825 = vadd.xlane.f32.xlu0 %v824
    %v826 = vpop.xlane.xlu0 %825
    %v827 = vsel %vm157, %v823, 0.0
    %828 = vadd.xlane.f32.xlu0 %v827
    %v829 = vpop.xlane.xlu0 %828
    %v830 = vmul.f32 %v826, %v247
    %v831 = vmul.f32 %v829, %v247
    %v832 = vsub.f32 %v822, %v830
    %v833 = vsub.f32 %v823, %v831
    %v834 = vmul.f32 %v832, %v832
    %v835 = vmul.f32 %v833, %v833
    %v836 = vsel %vm157, %v834, 0.0
    %837 = vadd.xlane.f32.xlu0 %v836
    %v838 = vpop.xlane.xlu0 %837
    %v839 = vsel %vm157, %v835, 0.0
    %840 = vadd.xlane.f32.xlu0 %v839
    %v841 = vpop.xlane.xlu0 %840
    %v842 = vmul.f32 %v838, %v247
    %v843 = vmul.f32 %v841, %v247
    %v844 = vadd.f32 %v842, 1e-05
    %v845 = vadd.f32 %v843, 1e-05
    %v846 = vrsqrt.pop %v844
    %v847 = vrsqrt.pop %v845
    %v848 = vmul.f32 %v832, %v846
    %v849 = vmul.f32 %v833, %v847
    %v850 = vlaneseq
    %v851 = vshrl.u32 %v850, 7
    %v852 = vsub.s32 5, %v851
    %v853 = vrot.slane %v505, %v852
    %v854 = vmul.f32 %v848, %v853
    %v855 = vmul.f32 %v849, %v853
    %v856 = vlaneseq
    %v857 = vshrl.u32 %v856, 7
    %v858 = vsub.s32 6, %v857
    %v859 = vrot.slane %v505, %v858
    %v860 = vadd.f32 %v854, %v859
    %v861 = vadd.f32 %v855, %v859
    %v862 = vld [vmem:[%s9] sm:$0xff]
    %v863 = vld [vmem:[%s9 + $0x8] sm:$0xff]
    %v864 = vld [vmem:[%s9 + $0x10] sm:$0xff]
    %v865 = vld [vmem:[%s9 + $0x18] sm:$0xff]
    %v866 = vld [vmem:[%s10] sm:$0x1]
    %v868 = vlaneseq
    %v869 = vshrl.u32 %v868, 7
    %v870 = vsub.s32 0, %v869
    %v871 = vrot.slane %v866, %v870
    %v874 = vsel %vm157, %v860, 0
    %v877 = vsel %vm157, %v861, 0
    %879 = vmatprep.subr.mxu0 0.0
    %880 = vmatpush1.msra.mxu0 0.0
    %881 = vmatprep.subr.mxu0 0.0
    %882 = vmatpush1.msra.mxu0 0.0
    %883 = vmatprep.subr.mxu0 0.0
    %884 = vmatpush1.msra.mxu0 0.0
    %885 = vmatprep.subr.mxu0 0.0
    %886 = vmatpush1.msra.mxu0 0.0
    %887 = vmatprep.subr.mxu0 0.0
    %888 = vmatpush1.msra.mxu0 0.0
    %889 = vmatprep.subr.mxu0 0.0
    %890 = vmatpush1.msra.mxu0 0.0
    %891 = vmatprep.subr.mxu0 0.0
    %892 = vmatpush1.msra.mxu0 0.0
    %893 = vmatprep.subr.mxu0 0.0
    %894 = vmatpush1.msra.mxu0 0.0
    %895 = vmatprep.subr.mxu0 0.0
    %896 = vmatpush1.msra.mxu0 0.0
    %897 = vmatprep.subr.mxu0 0.0
    %898 = vmatpush1.msra.mxu0 0.0
    %899 = vmatprep.subr.mxu0 0.0
    %900 = vmatpush1.msra.mxu0 0.0
    %901 = vmatprep.subr.mxu0 0.0
    %902 = vmatpush1.msra.mxu0 0.0
    %903 = vmatprep.subr.mxu0 0.0
    %904 = vmatpush1.msra.mxu0 %v865
    %905 = vmatprep.subr.mxu0 0.0
    %906 = vmatpush1.msra.mxu0 %v864
    %907 = vmatprep.subr.mxu0 0.0
    %908 = vmatpush1.msra.mxu0 %v863
    %909 = vmatprep.subr.mxu0 0.0
    %910 = vmatpush1.msra.mxu0 %v862
    %911 = vmatprep.subr.mxu0 0.0
    %912 = vmatpush2.msra.mxu0 0.0
    %913 = vmatprep.subr.mxu0 0.0
    %914 = vmatpush2.msra.mxu0 0.0
    %915 = vmatprep.subr.mxu0 0.0
    %916 = vmatpush2.msra.mxu0 0.0
    %917 = vmatprep.subr.mxu0 0.0
    %918 = vmatpush2.msra.mxu0 0.0
    %919 = vmatprep.subr.mxu0 0.0
    %920 = vmatpush2.msra.mxu0 0.0
    %921 = vmatprep.subr.mxu0 0.0
    %922 = vmatpush2.msra.mxu0 0.0
    %923 = vmatprep.subr.mxu0 0.0
    %924 = vmatpush2.msra.mxu0 0.0
    %925 = vmatprep.subr.mxu0 0.0
    %926 = vmatpush2.msra.mxu0 0.0
    %927 = vmatprep.subr.mxu0 0.0
    %928 = vmatpush2.msra.mxu0 0.0
    %929 = vmatprep.subr.mxu0 0.0
    %930 = vmatpush2.msra.mxu0 0.0
    %931 = vmatprep.subr.mxu0 0.0
    %932 = vmatpush2.msra.mxu0 0.0
    %933 = vmatprep.subr.mxu0 0.0
    %934 = vmatpush2.msra.mxu0 0.0
    %935 = vmatprep.subr.mxu0 0.0
    %936 = vmatpush2.msra.mxu0 0.0
    %937 = vmatprep.subr.mxu0 0.0
    %938 = vmatpush2.msra.mxu0 0.0
    %939 = vmatprep.subr.mxu0 0.0
    %940 = vmatpush2.msra.mxu0 0.0
    %941 = vmatprep.subr.mxu0 0.0
    %942 = vmatpush2.msra.mxu0 0.0
    %943 = vmatprep.mubr.f32.mxu0 0.0
    %944 = vmatmul.mubr.f32.gmra.mxu0 %v874
    %v945 = vpop.f32.mrf.mxu0
    %v946 = vadd.f32 %v871, %v945
    %v947 = vpop.f32.mrf.mxu0
    %948 = vmatprep.mubr.f32.mxu0 0.0
    %949 = vmatmul.mubr.f32.gmra.mxu0 %v877
    %v950 = vpop.f32.mrf.mxu0
    %v951 = vadd.f32 %v871, %v950
    %v952 = vpop.f32.mrf.mxu0
    %953 = vdwg.mxu0
    %v954 = vmax.f32 %v946, 0.0
    %v955 = vmax.f32 %v951, 0.0
    %v956 = vld [vmem:[%s11] sm:$0x1]
    %v957 = vld [vmem:[%s12] sm:$0x1]
    %v958 = vsel %vm157, %v954, 0.0
    %959 = vadd.xlane.f32.xlu0 %v958
    %v960 = vpop.xlane.xlu0 %959
    %v961 = vsel %vm157, %v955, 0.0
    %962 = vadd.xlane.f32.xlu0 %v961
    %v963 = vpop.xlane.xlu0 %962
    %v964 = vmul.f32 %v960, %v247
    %v965 = vmul.f32 %v963, %v247
    %v966 = vsub.f32 %v954, %v964
    %v967 = vsub.f32 %v955, %v965
    %v968 = vmul.f32 %v966, %v966
    %v969 = vmul.f32 %v967, %v967
    %v970 = vsel %vm157, %v968, 0.0
    %971 = vadd.xlane.f32.xlu0 %v970
    %v972 = vpop.xlane.xlu0 %971
    %v973 = vsel %vm157, %v969, 0.0
    %974 = vadd.xlane.f32.xlu0 %v973
    %v975 = vpop.xlane.xlu0 %974
    %v976 = vmul.f32 %v972, %v247
    %v977 = vmul.f32 %v975, %v247
    %v978 = vadd.f32 %v976, 1e-06
    %v979 = vadd.f32 %v977, 1e-06
    %v980 = vrsqrt.pop %v978
    %v981 = vrsqrt.pop %v979
    %v982 = vmul.f32 %v966, %v980
    %v983 = vmul.f32 %v967, %v981
    %v985 = vlaneseq
    %v986 = vshrl.u32 %v985, 7
    %v987 = vsub.s32 0, %v986
    %v988 = vrot.slane %v956, %v987
    %v990 = vmul.f32 %v982, %v988
    %v991 = vmul.f32 %v983, %v988
    %v993 = vlaneseq
    %v994 = vshrl.u32 %v993, 7
    %v995 = vsub.s32 0, %v994
    %v996 = vrot.slane %v957, %v995
    %v998 = vadd.f32 %v990, %v996
    %v999 = vadd.f32 %v991, %v996
    %v1000 = vadd.f32 %v998, %v999
    %v1001 = vld [vmem:[%s13] sm:$0x1]
    %v1003 = vsel %vm157, %v1001, 0
    %v1006 = vsel %vm157, %v1000, 0
    %1008 = vmatprep.subr.mxu0 0.0
    %1009 = vmatpush1.xpose.msra.mxu0 0.0
    %1010 = vmatprep.subr.mxu0 0.0
    %1011 = vmatpush1.xpose.msra.mxu0 0.0
    %1012 = vmatprep.subr.mxu0 0.0
    %1013 = vmatpush1.xpose.msra.mxu0 0.0
    %1014 = vmatprep.subr.mxu0 0.0
    %1015 = vmatpush1.xpose.msra.mxu0 0.0
    %1016 = vmatprep.subr.mxu0 0.0
    %1017 = vmatpush1.xpose.msra.mxu0 0.0
    %1018 = vmatprep.subr.mxu0 0.0
    %1019 = vmatpush1.xpose.msra.mxu0 0.0
    %1020 = vmatprep.subr.mxu0 0.0
    %1021 = vmatpush1.xpose.msra.mxu0 0.0
    %1022 = vmatprep.subr.mxu0 0.0
    %1023 = vmatpush1.xpose.msra.mxu0 0.0
    %1024 = vmatprep.subr.mxu0 0.0
    %1025 = vmatpush1.xpose.msra.mxu0 0.0
    %1026 = vmatprep.subr.mxu0 0.0
    %1027 = vmatpush1.xpose.msra.mxu0 0.0
    %1028 = vmatprep.subr.mxu0 0.0
    %1029 = vmatpush1.xpose.msra.mxu0 0.0
    %1030 = vmatprep.subr.mxu0 0.0
    %1031 = vmatpush1.xpose.msra.mxu0 0.0
    %1032 = vmatprep.subr.mxu0 0.0
    %1033 = vmatpush1.xpose.msra.mxu0 0.0
    %1034 = vmatprep.subr.mxu0 0.0
    %1035 = vmatpush1.xpose.msra.mxu0 0.0
    %1036 = vmatprep.subr.mxu0 0.0
    %1037 = vmatpush1.xpose.msra.mxu0 0.0
    %1038 = vmatprep.subr.mxu0 0.0
    %1039 = vmatpush1.xpose.msra.mxu0 %v1006
    %1040 = vmatprep.subr.mxu0 0.0
    %1041 = vmatpush2.xpose.msra.mxu0 0.0
    %1042 = vmatprep.subr.mxu0 0.0
    %1043 = vmatpush2.xpose.msra.mxu0 0.0
    %1044 = vmatprep.subr.mxu0 0.0
    %1045 = vmatpush2.xpose.msra.mxu0 0.0
    %1046 = vmatprep.subr.mxu0 0.0
    %1047 = vmatpush2.xpose.msra.mxu0 0.0
    %1048 = vmatprep.subr.mxu0 0.0
    %1049 = vmatpush2.xpose.msra.mxu0 0.0
    %1050 = vmatprep.subr.mxu0 0.0
    %1051 = vmatpush2.xpose.msra.mxu0 0.0
    %1052 = vmatprep.subr.mxu0 0.0
    %1053 = vmatpush2.xpose.msra.mxu0 0.0
    %1054 = vmatprep.subr.mxu0 0.0
    %1055 = vmatpush2.xpose.msra.mxu0 0.0
    %1056 = vmatprep.subr.mxu0 0.0
    %1057 = vmatpush2.xpose.msra.mxu0 0.0
    %1058 = vmatprep.subr.mxu0 0.0
    %1059 = vmatpush2.xpose.msra.mxu0 0.0
    %1060 = vmatprep.subr.mxu0 0.0
    %1061 = vmatpush2.xpose.msra.mxu0 0.0
    %1062 = vmatprep.subr.mxu0 0.0
    %1063 = vmatpush2.xpose.msra.mxu0 0.0
    %1064 = vmatprep.subr.mxu0 0.0
    %1065 = vmatpush2.xpose.msra.mxu0 0.0
    %1066 = vmatprep.subr.mxu0 0.0
    %1067 = vmatpush2.xpose.msra.mxu0 0.0
    %1068 = vmatprep.subr.mxu0 0.0
    %1069 = vmatpush2.xpose.msra.mxu0 0.0
    %1070 = vmatprep.subr.mxu0 0.0
    %1071 = vmatpush2.xpose.msra.mxu0 0.0
    %1072 = vmatprep.mubr.f32.mxu0 0.0
    %1073 = vmatmul.mubr.f32.gmra.mxu0 %v1003
    %v1074 = vpop.f32.mrf.mxu0
    %v1075 = vadd.f32 0.0, %v1074
    %v1076 = vpop.f32.mrf.mxu0
    %1077 = vdwg.mxu0
    %v1078 = vmul.f32 %v1075, 0.33333334
    %v1079 = vld [vmem:[%s14] sm:$0x1]
    %v1080 = vadd.f32 %v1078, %v1079
    %vm1081 = vcmask 57344
    %1082 = vst.msk [vmem:[#allocation2] sm:$0x1] %vm1081, %v1080
    %1083 = vst.msk [vmem:[#allocation4] sm:$0xff] %vm157, %v860
    // Predicated region
    $region62: #{tpu_custom_call.1} parent=1 // pred_check
      _
    $region63: #{tpu_custom_call.1} parent=1 // pred_check_branch
      %1085 = sbr.rel (0) target = $region65
    $region64: #{tpu_custom_call.1} parent=1 // pred_region
      %s1087 = ssub.s32 16, 16
      %1088 = vsyncadd [#allocation3], %s1087
      %s1090 = sshll.u32 [#allocation2], 4
      %s1091 = int_to_ptr.vmem [resolvable:$true] %s1090
      %1093 = dma.vmem_to_hbm [thread:$0]  %s1091, 16, %s15, [#allocation3]
    $region65: #{tpu_custom_call.1} parent=1 // pred_fallthru
      _
    // Predicated region
    $region66: #{tpu_custom_call.1} parent=1 // pred_check
      _
    $region67: #{tpu_custom_call.1} parent=1 // pred_check_branch
      %1095 = sbr.rel (0) target = $region69
    $region68: #{tpu_custom_call.1} parent=1 // pred_region
      %s1097 = ssub.s32 128, 128
      %1098 = vsyncadd [#allocation5], %s1097
      %s1100 = sshll.u32 [#allocation4], 4
      %s1101 = int_to_ptr.vmem [resolvable:$true] %s1100
      %1103 = dma.vmem_to_hbm [thread:$0]  %s1101, 128, %s16, [#allocation5]
    $region69: #{tpu_custom_call.1} parent=1 // pred_fallthru
      _
    // Predicated region
    $region70: #{tpu_custom_call.1} parent=1 // pred_check
      _
    $region71: #{tpu_custom_call.1} parent=1 // pred_check_branch
      %1105 = sbr.rel (0) target = $region73
    $region72: #{tpu_custom_call.1} parent=1 // pred_region
      %1106 = dma.done [#allocation3], 16
    $region73: #{tpu_custom_call.1} parent=1 // pred_fallthru
      _
    // Predicated region
    $region74: #{tpu_custom_call.1} parent=1 // pred_check
      _
    $region75: #{tpu_custom_call.1} parent=1 // pred_check_branch
      %1108 = sbr.rel (0) target = $region77
    $region76: #{tpu_custom_call.1} parent=1 // pred_region
      %1109 = dma.done [#allocation5], 128
    $region77: #{tpu_custom_call.1} parent=1 // pred_fallthru
      _
    %1110 = vsyncpa [#allocation3], 1
    %1111 = vsyncpa [#allocation5], 1

</llo_original>
